<compile_context>
chip_gen: v7x
topology: tpu7x:2x2x1
jax: 0.10.0
libtpu: 0.0.40
codegen_flags: <defaults>
</compile_context>

<pallas_src>
import functools

import numpy as np
import jax
import jax.numpy as jnp
from jax import lax
from jax.experimental import pallas as pl
from jax.experimental.pallas import tpu as pltpu

_EPS = 1e-8
_LRELU_SLOPE = 0.2
_LRELU_GAIN = float(np.sqrt(2.0))  # bias_act default gain for 'lrelu'


def _round_up(n, m):
    return ((n + m - 1) // m) * m


def _pad2d(x, rows, cols):
    return jnp.pad(x, ((0, rows - x.shape[0]), (0, cols - x.shape[1])))


# ---------------------------------------------------------------------------
# Fused mapping-network kernel.
#   refs layout (all in VMEM):
#     [z, w0z]              if z_dim  > 0
#     [c, ew, eb, w0y]      if c_dim  > 0
#     [b0]
#     [wrest, brest]        if num_layers > 1
#     [out]
# Weights are pre-scaled, pre-transposed ([in, out]) and zero-padded to
# lane/sublane-friendly shapes by pack_mapping_params().
# ---------------------------------------------------------------------------
def _mapping_kernel(*refs, z_dim, c_dim, embed_features, num_layers, mxu_dtype):
    refs = list(refs)
    o_ref = refs[-1]
    idx = 0
    acc = None

    if z_dim > 0:
        z_ref, w0z_ref = refs[idx], refs[idx + 1]
        idx += 2
        z = z_ref[...].astype(jnp.float32)
        # padded lanes are zero -> sum over padded array / real z_dim == mean.
        m = jnp.sum(z * z, axis=1, keepdims=True) * (1.0 / z_dim)
        zn = z * lax.rsqrt(m + _EPS)
        acc = jnp.dot(zn.astype(mxu_dtype), w0z_ref[...],
                      preferred_element_type=jnp.float32)

    if c_dim > 0:
        c_ref, ew_ref, eb_ref, w0y_ref = refs[idx:idx + 4]
        idx += 4
        cc = c_ref[...].astype(jnp.float32)
        # embed: linear FC (gains folded into ew / eb outside the kernel).
        y = jnp.dot(cc.astype(mxu_dtype), ew_ref[...],
                    preferred_element_type=jnp.float32) + eb_ref[...]
        m = jnp.sum(y * y, axis=1, keepdims=True) * (1.0 / embed_features)
        yn = y * lax.rsqrt(m + _EPS)
        t = jnp.dot(yn.astype(mxu_dtype), w0y_ref[...],
                    preferred_element_type=jnp.float32)
        acc = t if acc is None else acc + t

    b0_ref = refs[idx]
    idx += 1
    x = acc + b0_ref[...]
    x = jnp.where(x >= 0.0, x, _LRELU_SLOPE * x) * _LRELU_GAIN

    if num_layers > 1:
        wrest_ref, brest_ref = refs[idx], refs[idx + 1]
        idx += 2
        for li in range(num_layers - 1):          # static unroll over layers
            t = jnp.dot(x.astype(mxu_dtype), wrest_ref[li],
                        preferred_element_type=jnp.float32) + brest_ref[li]
            x = jnp.where(t >= 0.0, t, _LRELU_SLOPE * t) * _LRELU_GAIN

    o_ref[...] = x


# ---------------------------------------------------------------------------
# Parameter init (matches the PyTorch __init__ shapes / scaling)
# ---------------------------------------------------------------------------
def init_mapping_params(key, z_dim, c_dim, w_dim, num_layers=8,
                        lr_multiplier=0.01):
    embed_features = w_dim if c_dim > 0 else 0
    layer_features = w_dim
    features = [z_dim + embed_features] + [layer_features] * (num_layers - 1) + [w_dim]

    keys = jax.random.split(key, num_layers + 1)
    params = {}
    if c_dim > 0:
        # FullyConnectedLayer(c_dim, embed_features): lr_multiplier=1, bias_init=0
        params["embed_w"] = jax.random.normal(
            keys[0], (embed_features, c_dim), jnp.float32)
        params["embed_b"] = jnp.zeros((embed_features,), jnp.float32)

    fcs = []
    for i in range(num_layers):
        # torch.randn([out, in]) / lr_multiplier
        w = jax.random.normal(
            keys[i + 1], (features[i + 1], features[i]), jnp.float32
        ) / lr_multiplier
        b = jnp.zeros((features[i + 1],), jnp.float32)  # bias_init = 0
        fcs.append((w, b))
    params["fcs"] = fcs
    return params


# ---------------------------------------------------------------------------
# One-time weight packing: fold equalized-LR gains, transpose to [in, out],
# zero-pad to (8,128)-friendly shapes, stack the hidden layers, cast MXU
# inputs to mxu_dtype.  Do this ONCE per parameter set, not per forward call.
# ---------------------------------------------------------------------------
def pack_mapping_params(params, *, z_dim, c_dim, w_dim, num_layers=8,
                        lr_multiplier=0.01, mxu_dtype=jnp.bfloat16):
    assert num_layers >= 1
    embed_features = w_dim if c_dim > 0 else 0
    in0 = z_dim + embed_features
    Fp = _round_up(w_dim, 128)                     # lane-dense hidden/out dim

    packed = {}

    # ---- first FC layer: fold gain, transpose to [in, out], split z/embed ----
    w0, b0 = params["fcs"][0]
    w0_gain = float(lr_multiplier) / float(np.sqrt(in0))
    w0t = (w0.astype(jnp.float32) * w0_gain).T     # [in0, w_dim]

    if z_dim > 0:
        Zp = _round_up(z_dim, 128)
        packed["w0z"] = _pad2d(w0t[:z_dim], Zp, Fp).astype(mxu_dtype)

    if c_dim > 0:
        Cp = _round_up(c_dim, 128)
        Ep = _round_up(embed_features, 128)
        ew = params["embed_w"].astype(jnp.float32) * (1.0 / float(np.sqrt(c_dim)))
        packed["ew"] = _pad2d(ew.T, Cp, Ep).astype(mxu_dtype)              # [Cp, Ep]
        packed["eb"] = _pad2d(params["embed_b"].astype(jnp.float32)[None, :], 1, Ep)
        packed["w0y"] = _pad2d(w0t[z_dim:], Ep, Fp).astype(mxu_dtype)

    packed["b0"] = _pad2d(
        (b0.astype(jnp.float32) * float(lr_multiplier))[None, :], 1, Fp)

    # ---- remaining layers: stacked, pre-scaled, pre-transposed, padded ----
    if num_layers > 1:
        ws, bs = [], []
        for (w, b) in params["fcs"][1:]:
            gain = float(lr_multiplier) / float(np.sqrt(w.shape[1]))
            ws.append(_pad2d((w.astype(jnp.float32) * gain).T, Fp, Fp))
            bs.append(_pad2d(
                (b.astype(jnp.float32) * float(lr_multiplier))[None, :], 1, Fp))
        packed["wrest"] = jnp.stack(ws).astype(mxu_dtype)   # [L-1, Fp, Fp]
        packed["brest"] = jnp.stack(bs)                     # [L-1, 1, Fp] (f32)

    packed["meta"] = dict(z_dim=z_dim, c_dim=c_dim, w_dim=w_dim,
                          embed_features=embed_features, num_layers=num_layers,
                          Fp=Fp, mxu_dtype=mxu_dtype)
    return packed


# ---------------------------------------------------------------------------
# Origin_MappingNetwork.forward (default args: truncation_psi=1,
# truncation_cutoff=None, update_emas=False)
# ---------------------------------------------------------------------------
def mapping_network_forward(packed, z, c, *, num_ws, batch_tile=256):
    meta = packed["meta"]
    z_dim = meta["z_dim"]
    c_dim = meta["c_dim"]
    w_dim = meta["w_dim"]
    embed_features = meta["embed_features"]
    num_layers = meta["num_layers"]
    Fp = meta["Fp"]
    mxu_dtype = meta["mxu_dtype"]

    B = z.shape[0] if z_dim > 0 else c.shape[0]

    # --- batch tiling: aim for >= 2 tiles (v7x megacore) with minimal padding ---
    B8 = _round_up(max(B, 1), 8)
    btmax = _round_up(batch_tile, 8)
    if B8 <= 8:
        bt = 8
    else:
        n_tiles = max(2, pl.cdiv(B8, btmax))
        bt = _round_up(pl.cdiv(B8, n_tiles), 8)
    Bp = _round_up(B8, bt)
    grid = (Bp // bt,)

    inputs, in_specs = [], []
    # Grid-invariant weights/biases: whole array resident in VMEM,
    # single-buffered (no pipelining / no 2x double-buffer).
    weight_spec = pl.BlockSpec(memory_space=pltpu.MemorySpace.VMEM)

    def add_weight(arr):
        inputs.append(arr)
        in_specs.append(weight_spec)

    def add_batched(arr):   # [Bp, F] activation streamed in batch tiles
        inputs.append(arr)
        in_specs.append(pl.BlockSpec((bt, arr.shape[1]), lambda i: (i, 0)))

    if z_dim > 0:
        Zp = _round_up(z_dim, 128)
        add_batched(_pad2d(z.astype(jnp.float32), Bp, Zp))
        add_weight(packed["w0z"])

    if c_dim > 0:
        Cp = _round_up(c_dim, 128)
        add_batched(_pad2d(c.astype(jnp.float32), Bp, Cp))
        add_weight(packed["ew"])
        add_weight(packed["eb"])
        add_weight(packed["w0y"])

    add_weight(packed["b0"])

    if num_layers > 1:
        add_weight(packed["wrest"])
        add_weight(packed["brest"])

    # --- VMEM budget + cost estimate ---
    weight_bytes = sum(int(v.size) * v.dtype.itemsize
                       for k, v in packed.items() if k != "meta")
    stream_bytes = 2 * bt * Fp * 4                       # double-buffered output tile
    if z_dim > 0:
        stream_bytes += 2 * bt * _round_up(z_dim, 128) * 4
    if c_dim > 0:
        stream_bytes += 2 * bt * _round_up(c_dim, 128) * 4
    vmem_limit = int(min(max(int(1.5 * (weight_bytes + stream_bytes)) + (8 << 20),
                             32 << 20), 100 << 20))

    flops = 2 * B * (z_dim * w_dim
                     + (c_dim * embed_features + embed_features * w_dim)
                     + (num_layers - 1) * w_dim * w_dim)
    io_bytes = weight_bytes + Bp * Fp * 4
    if z_dim > 0:
        io_bytes += Bp * _round_up(z_dim, 128) * 4
    if c_dim > 0:
        io_bytes += Bp * _round_up(c_dim, 128) * 4
    cost = pl.CostEstimate(flops=int(flops), transcendentals=int(2 * B),
                           bytes_accessed=int(io_bytes))

    kernel = functools.partial(
        _mapping_kernel, z_dim=z_dim, c_dim=c_dim,
        embed_features=embed_features, num_layers=num_layers,
        mxu_dtype=mxu_dtype)

    out = pl.pallas_call(
        kernel,
        grid=grid,
        out_shape=jax.ShapeDtypeStruct((Bp, Fp), jnp.float32),
        in_specs=in_specs,
        out_specs=pl.BlockSpec((bt, Fp), lambda i: (i, 0)),
        compiler_params=pltpu.CompilerParams(
            dimension_semantics=("parallel",),
            vmem_limit_bytes=vmem_limit),
        cost_estimate=cost,
    )(*inputs)

    x = out[:B, :w_dim]

    # broadcast: x.unsqueeze(1).repeat([1, num_ws, 1])  (pure layout glue)
    if num_ws is not None:
        x = jnp.broadcast_to(x[:, None, :], (B, num_ws, w_dim))

    # TODO(synk): update_emas (w_avg EMA writeback) and truncation_psi != 1 /
    # truncation_cutoff branches are disabled under the default forward args
    # and are not implemented.
    return x


# ---------------------------------------------------------------------------
# Pure-JAX reference (mirrors the PyTorch forward) for correctness checking.
# ---------------------------------------------------------------------------
def _reference_forward(params, z, c, *, z_dim, c_dim, w_dim, num_ws,
                       num_layers, lr_multiplier):
    def norm(x):
        return x * lax.rsqrt(jnp.mean(x * x, axis=1, keepdims=True) + _EPS)

    x = None
    if z_dim > 0:
        x = norm(z.astype(jnp.float32))
    if c_dim > 0:
        ew = params["embed_w"] * (1.0 / np.sqrt(c_dim))
        y = c.astype(jnp.float32) @ ew.T + params["embed_b"][None, :]
        y = norm(y)
        x = jnp.concatenate([x, y], axis=1) if x is not None else y
    for (w, b) in params["fcs"]:
        gain = lr_multiplier / np.sqrt(w.shape[1])
        t = x @ (w * gain).T + (b * lr_multiplier)[None, :]
        x = jnp.where(t >= 0.0, t, _LRELU_SLOPE * t) * _LRELU_GAIN
    if num_ws is not None:
        x = jnp.broadcast_to(x[:, None, :], (x.shape[0], num_ws, w_dim))
    return x


if __name__ == "__main__":
    # Small but representative config.
    Z_DIM, C_DIM, W_DIM, NUM_WS, NUM_LAYERS = 32, 8, 32, 4, 8
    BATCH = 4
    LR_MULT = 0.01

    key = jax.random.PRNGKey(0)
    kp, kz, kc = jax.random.split(key, 3)

    params = init_mapping_params(kp, Z_DIM, C_DIM, W_DIM,
                                 num_layers=NUM_LAYERS, lr_multiplier=LR_MULT)
    z = jax.random.normal(kz, (BATCH, Z_DIM), jnp.float32)
    c = jax.random.normal(kc, (BATCH, C_DIM), jnp.float32)

    ref = _reference_forward(
        params, z, c, z_dim=Z_DIM, c_dim=C_DIM, w_dim=W_DIM, num_ws=NUM_WS,
        num_layers=NUM_LAYERS, lr_multiplier=LR_MULT)
    ref = jax.block_until_ready(ref)

    # ---- f32 MXU path: bit-faithful check against the reference ----
    packed_f32 = pack_mapping_params(
        params, z_dim=Z_DIM, c_dim=C_DIM, w_dim=W_DIM, num_layers=NUM_LAYERS,
        lr_multiplier=LR_MULT, mxu_dtype=jnp.float32)
    out_f32 = jax.block_until_ready(
        mapping_network_forward(packed_f32, z, c, num_ws=NUM_WS))

    assert out_f32.shape == (BATCH, NUM_WS, W_DIM), out_f32.shape
    assert out_f32.dtype == jnp.float32
    assert bool(jnp.all(jnp.isfinite(out_f32)))
    assert bool(jnp.allclose(out_f32, ref, rtol=1e-4, atol=1e-5)), (
        float(jnp.max(jnp.abs(out_f32 - ref))))

    # ---- default bf16 MXU path (fast path): loose-tolerance check ----
    packed_bf16 = pack_mapping_params(
        params, z_dim=Z_DIM, c_dim=C_DIM, w_dim=W_DIM, num_layers=NUM_LAYERS,
        lr_multiplier=LR_MULT)  # mxu_dtype defaults to bfloat16
    out_bf16 = jax.block_until_ready(
        mapping_network_forward(packed_bf16, z, c, num_ws=NUM_WS))

    assert out_bf16.shape == (BATCH, NUM_WS, W_DIM), out_bf16.shape
    assert out_bf16.dtype == jnp.float32
    assert bool(jnp.all(jnp.isfinite(out_bf16)))
    assert bool(jnp.allclose(out_bf16, ref, rtol=1e-1, atol=1e-1)), (
        float(jnp.max(jnp.abs(out_bf16 - ref))))

    print("KERNEL_OK")
</pallas_src>

<mosaic_0001>
module attributes {stable_mosaic.version = 11 : i64} {
  func.func @_mapping_kernel(%arg0: i32, %arg1: memref<8x128xf32, #tpu.memory_space<vmem>>, %arg2: memref<128x128xf32, #tpu.memory_space<vmem>>, %arg3: memref<8x128xf32, #tpu.memory_space<vmem>>, %arg4: memref<128x128xf32, #tpu.memory_space<vmem>>, %arg5: memref<1x128xf32, #tpu.memory_space<vmem>>, %arg6: memref<128x128xf32, #tpu.memory_space<vmem>>, %arg7: memref<1x128xf32, #tpu.memory_space<vmem>>, %arg8: memref<7x128x128xf32, #tpu.memory_space<vmem>>, %arg9: memref<7x1x128xf32, #tpu.memory_space<vmem>>, %arg10: memref<8x128xf32, #tpu.memory_space<vmem>>) attributes {dimension_semantics = [#tpu.dimension_semantics<parallel>], iteration_bounds = array<i64: 1>, scalar_prefetch = 0 : i64, scratch_operands = 0 : i64, tpu.core_type = #tpu.core_type<tc>, window_params = [{transform_indices = @transform_0, window_bounds = array<i64: 8, 128>}, {pipeline_mode = #tpu.pipeline_mode<synchronous>, transform_indices = @transform_1, window_bounds = array<i64: 128, 128>}, {transform_indices = @transform_2, window_bounds = array<i64: 8, 128>}, {pipeline_mode = #tpu.pipeline_mode<synchronous>, transform_indices = @transform_3, window_bounds = array<i64: 128, 128>}, {pipeline_mode = #tpu.pipeline_mode<synchronous>, transform_indices = @transform_4, window_bounds = array<i64: 1, 128>}, {pipeline_mode = #tpu.pipeline_mode<synchronous>, transform_indices = @transform_5, window_bounds = array<i64: 128, 128>}, {pipeline_mode = #tpu.pipeline_mode<synchronous>, transform_indices = @transform_6, window_bounds = array<i64: 1, 128>}, {pipeline_mode = #tpu.pipeline_mode<synchronous>, transform_indices = @transform_7, window_bounds = array<i64: 7, 128, 128>}, {pipeline_mode = #tpu.pipeline_mode<synchronous>, transform_indices = @transform_8, window_bounds = array<i64: 7, 1, 128>}, {transform_indices = @transform_9, window_bounds = array<i64: 8, 128>}]} {
    %c0 = arith.constant 0 : index
    %c0_0 = arith.constant 0 : index
    %0 = vector.load %arg1[%c0, %c0_0] : memref<8x128xf32, #tpu.memory_space<vmem>>, vector<8x128xf32>
    %1 = arith.mulf %0, %0 : vector<8x128xf32>
    %cst = arith.constant dense<0.000000e+00> : vector<8xf32>
    %2 = vector.multi_reduction <add>, %1, %cst [1] : vector<8x128xf32> to vector<8xf32>
    %3 = vector.shape_cast %2 : vector<8xf32> to vector<8x1xf32>
    %cst_1 = arith.constant 3.125000e-02 : f32
    %4 = vector.broadcast %cst_1 : f32 to vector<8x1xf32>
    %5 = arith.mulf %3, %4 : vector<8x1xf32>
    %cst_2 = arith.constant 9.99999993E-9 : f32
    %6 = vector.broadcast %cst_2 : f32 to vector<8x1xf32>
    %7 = arith.addf %5, %6 : vector<8x1xf32>
    %8 = math.rsqrt %7 : vector<8x1xf32>
    %9 = vector.broadcast %8 : vector<8x1xf32> to vector<8x128xf32>
    %10 = arith.mulf %0, %9 : vector<8x128xf32>
    %c0_3 = arith.constant 0 : index
    %c0_4 = arith.constant 0 : index
    %11 = vector.load %arg2[%c0_3, %c0_4] : memref<128x128xf32, #tpu.memory_space<vmem>>, vector<128x128xf32>
    %cst_5 = arith.constant dense<0.000000e+00> : vector<8x128xf32>
    %12 = tpu.matmul %10, %11, %cst_5 {dimension_numbers = #tpu.dot_dimension_numbers<[1], [0], [0], [1], [0, 0, 1, 1], [], []>} : vector<8x128xf32>, vector<128x128xf32>, vector<8x128xf32> -> vector<8x128xf32>
    %c0_6 = arith.constant 0 : index
    %c0_7 = arith.constant 0 : index
    %13 = vector.load %arg3[%c0_6, %c0_7] : memref<8x128xf32, #tpu.memory_space<vmem>>, vector<8x128xf32>
    %c0_8 = arith.constant 0 : index
    %c0_9 = arith.constant 0 : index
    %14 = vector.load %arg4[%c0_8, %c0_9] : memref<128x128xf32, #tpu.memory_space<vmem>>, vector<128x128xf32>
    %cst_10 = arith.constant dense<0.000000e+00> : vector<8x128xf32>
    %15 = tpu.matmul %13, %14, %cst_10 {dimension_numbers = #tpu.dot_dimension_numbers<[1], [0], [0], [1], [0, 0, 1, 1], [], []>} : vector<8x128xf32>, vector<128x128xf32>, vector<8x128xf32> -> vector<8x128xf32>
    %c0_11 = arith.constant 0 : index
    %c0_12 = arith.constant 0 : index
    %16 = vector.load %arg5[%c0_11, %c0_12] : memref<1x128xf32, #tpu.memory_space<vmem>>, vector<1x128xf32>
    %17 = vector.broadcast %16 : vector<1x128xf32> to vector<8x128xf32>
    %18 = arith.addf %15, %17 : vector<8x128xf32>
    %19 = arith.mulf %18, %18 : vector<8x128xf32>
    %cst_13 = arith.constant dense<0.000000e+00> : vector<8xf32>
    %20 = vector.multi_reduction <add>, %19, %cst_13 [1] : vector<8x128xf32> to vector<8xf32>
    %21 = vector.shape_cast %20 : vector<8xf32> to vector<8x1xf32>
    %cst_14 = arith.constant 3.125000e-02 : f32
    %22 = vector.broadcast %cst_14 : f32 to vector<8x1xf32>
    %23 = arith.mulf %21, %22 : vector<8x1xf32>
    %cst_15 = arith.constant 9.99999993E-9 : f32
    %24 = vector.broadcast %cst_15 : f32 to vector<8x1xf32>
    %25 = arith.addf %23, %24 : vector<8x1xf32>
    %26 = math.rsqrt %25 : vector<8x1xf32>
    %27 = vector.broadcast %26 : vector<8x1xf32> to vector<8x128xf32>
    %28 = arith.mulf %18, %27 : vector<8x128xf32>
    %c0_16 = arith.constant 0 : index
    %c0_17 = arith.constant 0 : index
    %29 = vector.load %arg6[%c0_16, %c0_17] : memref<128x128xf32, #tpu.memory_space<vmem>>, vector<128x128xf32>
    %cst_18 = arith.constant dense<0.000000e+00> : vector<8x128xf32>
    %30 = tpu.matmul %28, %29, %cst_18 {dimension_numbers = #tpu.dot_dimension_numbers<[1], [0], [0], [1], [0, 0, 1, 1], [], []>} : vector<8x128xf32>, vector<128x128xf32>, vector<8x128xf32> -> vector<8x128xf32>
    %31 = arith.addf %12, %30 : vector<8x128xf32>
    %c0_19 = arith.constant 0 : index
    %c0_20 = arith.constant 0 : index
    %32 = vector.load %arg7[%c0_19, %c0_20] : memref<1x128xf32, #tpu.memory_space<vmem>>, vector<1x128xf32>
    %33 = vector.broadcast %32 : vector<1x128xf32> to vector<8x128xf32>
    %34 = arith.addf %31, %33 : vector<8x128xf32>
    %cst_21 = arith.constant 0.000000e+00 : f32
    %35 = vector.broadcast %cst_21 : f32 to vector<8x128xf32>
    %36 = arith.cmpf oge, %34, %35 : vector<8x128xf32>
    %cst_22 = arith.constant 2.000000e-01 : f32
    %37 = vector.broadcast %cst_22 : f32 to vector<8x128xf32>
    %38 = arith.mulf %37, %34 : vector<8x128xf32>
    %39 = arith.select %36, %34, %38 : vector<8x128xi1>, vector<8x128xf32>
    %cst_23 = arith.constant 1.41421354 : f32
    %40 = vector.broadcast %cst_23 : f32 to vector<8x128xf32>
    %41 = arith.mulf %39, %40 : vector<8x128xf32>
    %c0_24 = arith.constant 0 : index
    %c0_25 = arith.constant 0 : index
    %c0_26 = arith.constant 0 : index
    %42 = vector.load %arg8[%c0_24, %c0_25, %c0_26] : memref<7x128x128xf32, #tpu.memory_space<vmem>>, vector<1x128x128xf32>
    %43 = vector.shape_cast %42 : vector<1x128x128xf32> to vector<128x128xf32>
    %cst_27 = arith.constant dense<0.000000e+00> : vector<8x128xf32>
    %44 = tpu.matmul %41, %43, %cst_27 {dimension_numbers = #tpu.dot_dimension_numbers<[1], [0], [0], [1], [0, 0, 1, 1], [], []>} : vector<8x128xf32>, vector<128x128xf32>, vector<8x128xf32> -> vector<8x128xf32>
    %c0_28 = arith.constant 0 : index
    %c0_29 = arith.constant 0 : index
    %c0_30 = arith.constant 0 : index
    %45 = vector.load %arg9[%c0_28, %c0_29, %c0_30] : memref<7x1x128xf32, #tpu.memory_space<vmem>>, vector<1x1x128xf32>
    %46 = vector.shape_cast %45 : vector<1x1x128xf32> to vector<1x128xf32>
    %47 = vector.broadcast %46 : vector<1x128xf32> to vector<8x128xf32>
    %48 = arith.addf %44, %47 : vector<8x128xf32>
    %cst_31 = arith.constant 0.000000e+00 : f32
    %49 = vector.broadcast %cst_31 : f32 to vector<8x128xf32>
    %50 = arith.cmpf oge, %48, %49 : vector<8x128xf32>
    %cst_32 = arith.constant 2.000000e-01 : f32
    %51 = vector.broadcast %cst_32 : f32 to vector<8x128xf32>
    %52 = arith.mulf %51, %48 : vector<8x128xf32>
    %53 = arith.select %50, %48, %52 : vector<8x128xi1>, vector<8x128xf32>
    %cst_33 = arith.constant 1.41421354 : f32
    %54 = vector.broadcast %cst_33 : f32 to vector<8x128xf32>
    %55 = arith.mulf %53, %54 : vector<8x128xf32>
    %c1 = arith.constant 1 : index
    %c0_34 = arith.constant 0 : index
    %c0_35 = arith.constant 0 : index
    %56 = vector.load %arg8[%c1, %c0_34, %c0_35] : memref<7x128x128xf32, #tpu.memory_space<vmem>>, vector<1x128x128xf32>
    %57 = vector.shape_cast %56 : vector<1x128x128xf32> to vector<128x128xf32>
    %cst_36 = arith.constant dense<0.000000e+00> : vector<8x128xf32>
    %58 = tpu.matmul %55, %57, %cst_36 {dimension_numbers = #tpu.dot_dimension_numbers<[1], [0], [0], [1], [0, 0, 1, 1], [], []>} : vector<8x128xf32>, vector<128x128xf32>, vector<8x128xf32> -> vector<8x128xf32>
    %c1_37 = arith.constant 1 : index
    %c0_38 = arith.constant 0 : index
    %c0_39 = arith.constant 0 : index
    %59 = vector.load %arg9[%c1_37, %c0_38, %c0_39] : memref<7x1x128xf32, #tpu.memory_space<vmem>>, vector<1x1x128xf32>
    %60 = vector.shape_cast %59 : vector<1x1x128xf32> to vector<1x128xf32>
    %61 = vector.broadcast %60 : vector<1x128xf32> to vector<8x128xf32>
    %62 = arith.addf %58, %61 : vector<8x128xf32>
    %cst_40 = arith.constant 0.000000e+00 : f32
    %63 = vector.broadcast %cst_40 : f32 to vector<8x128xf32>
    %64 = arith.cmpf oge, %62, %63 : vector<8x128xf32>
    %cst_41 = arith.constant 2.000000e-01 : f32
    %65 = vector.broadcast %cst_41 : f32 to vector<8x128xf32>
    %66 = arith.mulf %65, %62 : vector<8x128xf32>
    %67 = arith.select %64, %62, %66 : vector<8x128xi1>, vector<8x128xf32>
    %cst_42 = arith.constant 1.41421354 : f32
    %68 = vector.broadcast %cst_42 : f32 to vector<8x128xf32>
    %69 = arith.mulf %67, %68 : vector<8x128xf32>
    %c2 = arith.constant 2 : index
    %c0_43 = arith.constant 0 : index
    %c0_44 = arith.constant 0 : index
    %70 = vector.load %arg8[%c2, %c0_43, %c0_44] : memref<7x128x128xf32, #tpu.memory_space<vmem>>, vector<1x128x128xf32>
    %71 = vector.shape_cast %70 : vector<1x128x128xf32> to vector<128x128xf32>
    %cst_45 = arith.constant dense<0.000000e+00> : vector<8x128xf32>
    %72 = tpu.matmul %69, %71, %cst_45 {dimension_numbers = #tpu.dot_dimension_numbers<[1], [0], [0], [1], [0, 0, 1, 1], [], []>} : vector<8x128xf32>, vector<128x128xf32>, vector<8x128xf32> -> vector<8x128xf32>
    %c2_46 = arith.constant 2 : index
    %c0_47 = arith.constant 0 : index
    %c0_48 = arith.constant 0 : index
    %73 = vector.load %arg9[%c2_46, %c0_47, %c0_48] : memref<7x1x128xf32, #tpu.memory_space<vmem>>, vector<1x1x128xf32>
    %74 = vector.shape_cast %73 : vector<1x1x128xf32> to vector<1x128xf32>
    %75 = vector.broadcast %74 : vector<1x128xf32> to vector<8x128xf32>
    %76 = arith.addf %72, %75 : vector<8x128xf32>
    %cst_49 = arith.constant 0.000000e+00 : f32
    %77 = vector.broadcast %cst_49 : f32 to vector<8x128xf32>
    %78 = arith.cmpf oge, %76, %77 : vector<8x128xf32>
    %cst_50 = arith.constant 2.000000e-01 : f32
    %79 = vector.broadcast %cst_50 : f32 to vector<8x128xf32>
    %80 = arith.mulf %79, %76 : vector<8x128xf32>
    %81 = arith.select %78, %76, %80 : vector<8x128xi1>, vector<8x128xf32>
    %cst_51 = arith.constant 1.41421354 : f32
    %82 = vector.broadcast %cst_51 : f32 to vector<8x128xf32>
    %83 = arith.mulf %81, %82 : vector<8x128xf32>
    %c3 = arith.constant 3 : index
    %c0_52 = arith.constant 0 : index
    %c0_53 = arith.constant 0 : index
    %84 = vector.load %arg8[%c3, %c0_52, %c0_53] : memref<7x128x128xf32, #tpu.memory_space<vmem>>, vector<1x128x128xf32>
    %85 = vector.shape_cast %84 : vector<1x128x128xf32> to vector<128x128xf32>
    %cst_54 = arith.constant dense<0.000000e+00> : vector<8x128xf32>
    %86 = tpu.matmul %83, %85, %cst_54 {dimension_numbers = #tpu.dot_dimension_numbers<[1], [0], [0], [1], [0, 0, 1, 1], [], []>} : vector<8x128xf32>, vector<128x128xf32>, vector<8x128xf32> -> vector<8x128xf32>
    %c3_55 = arith.constant 3 : index
    %c0_56 = arith.constant 0 : index
    %c0_57 = arith.constant 0 : index
    %87 = vector.load %arg9[%c3_55, %c0_56, %c0_57] : memref<7x1x128xf32, #tpu.memory_space<vmem>>, vector<1x1x128xf32>
    %88 = vector.shape_cast %87 : vector<1x1x128xf32> to vector<1x128xf32>
    %89 = vector.broadcast %88 : vector<1x128xf32> to vector<8x128xf32>
    %90 = arith.addf %86, %89 : vector<8x128xf32>
    %cst_58 = arith.constant 0.000000e+00 : f32
    %91 = vector.broadcast %cst_58 : f32 to vector<8x128xf32>
    %92 = arith.cmpf oge, %90, %91 : vector<8x128xf32>
    %cst_59 = arith.constant 2.000000e-01 : f32
    %93 = vector.broadcast %cst_59 : f32 to vector<8x128xf32>
    %94 = arith.mulf %93, %90 : vector<8x128xf32>
    %95 = arith.select %92, %90, %94 : vector<8x128xi1>, vector<8x128xf32>
    %cst_60 = arith.constant 1.41421354 : f32
    %96 = vector.broadcast %cst_60 : f32 to vector<8x128xf32>
    %97 = arith.mulf %95, %96 : vector<8x128xf32>
    %c4 = arith.constant 4 : index
    %c0_61 = arith.constant 0 : index
    %c0_62 = arith.constant 0 : index
    %98 = vector.load %arg8[%c4, %c0_61, %c0_62] : memref<7x128x128xf32, #tpu.memory_space<vmem>>, vector<1x128x128xf32>
    %99 = vector.shape_cast %98 : vector<1x128x128xf32> to vector<128x128xf32>
    %cst_63 = arith.constant dense<0.000000e+00> : vector<8x128xf32>
    %100 = tpu.matmul %97, %99, %cst_63 {dimension_numbers = #tpu.dot_dimension_numbers<[1], [0], [0], [1], [0, 0, 1, 1], [], []>} : vector<8x128xf32>, vector<128x128xf32>, vector<8x128xf32> -> vector<8x128xf32>
    %c4_64 = arith.constant 4 : index
    %c0_65 = arith.constant 0 : index
    %c0_66 = arith.constant 0 : index
    %101 = vector.load %arg9[%c4_64, %c0_65, %c0_66] : memref<7x1x128xf32, #tpu.memory_space<vmem>>, vector<1x1x128xf32>
    %102 = vector.shape_cast %101 : vector<1x1x128xf32> to vector<1x128xf32>
    %103 = vector.broadcast %102 : vector<1x128xf32> to vector<8x128xf32>
    %104 = arith.addf %100, %103 : vector<8x128xf32>
    %cst_67 = arith.constant 0.000000e+00 : f32
    %105 = vector.broadcast %cst_67 : f32 to vector<8x128xf32>
    %106 = arith.cmpf oge, %104, %105 : vector<8x128xf32>
    %cst_68 = arith.constant 2.000000e-01 : f32
    %107 = vector.broadcast %cst_68 : f32 to vector<8x128xf32>
    %108 = arith.mulf %107, %104 : vector<8x128xf32>
    %109 = arith.select %106, %104, %108 : vector<8x128xi1>, vector<8x128xf32>
    %cst_69 = arith.constant 1.41421354 : f32
    %110 = vector.broadcast %cst_69 : f32 to vector<8x128xf32>
    %111 = arith.mulf %109, %110 : vector<8x128xf32>
    %c5 = arith.constant 5 : index
    %c0_70 = arith.constant 0 : index
    %c0_71 = arith.constant 0 : index
    %112 = vector.load %arg8[%c5, %c0_70, %c0_71] : memref<7x128x128xf32, #tpu.memory_space<vmem>>, vector<1x128x128xf32>
    %113 = vector.shape_cast %112 : vector<1x128x128xf32> to vector<128x128xf32>
    %cst_72 = arith.constant dense<0.000000e+00> : vector<8x128xf32>
    %114 = tpu.matmul %111, %113, %cst_72 {dimension_numbers = #tpu.dot_dimension_numbers<[1], [0], [0], [1], [0, 0, 1, 1], [], []>} : vector<8x128xf32>, vector<128x128xf32>, vector<8x128xf32> -> vector<8x128xf32>
    %c5_73 = arith.constant 5 : index
    %c0_74 = arith.constant 0 : index
    %c0_75 = arith.constant 0 : index
    %115 = vector.load %arg9[%c5_73, %c0_74, %c0_75] : memref<7x1x128xf32, #tpu.memory_space<vmem>>, vector<1x1x128xf32>
    %116 = vector.shape_cast %115 : vector<1x1x128xf32> to vector<1x128xf32>
    %117 = vector.broadcast %116 : vector<1x128xf32> to vector<8x128xf32>
    %118 = arith.addf %114, %117 : vector<8x128xf32>
    %cst_76 = arith.constant 0.000000e+00 : f32
    %119 = vector.broadcast %cst_76 : f32 to vector<8x128xf32>
    %120 = arith.cmpf oge, %118, %119 : vector<8x128xf32>
    %cst_77 = arith.constant 2.000000e-01 : f32
    %121 = vector.broadcast %cst_77 : f32 to vector<8x128xf32>
    %122 = arith.mulf %121, %118 : vector<8x128xf32>
    %123 = arith.select %120, %118, %122 : vector<8x128xi1>, vector<8x128xf32>
    %cst_78 = arith.constant 1.41421354 : f32
    %124 = vector.broadcast %cst_78 : f32 to vector<8x128xf32>
    %125 = arith.mulf %123, %124 : vector<8x128xf32>
    %c6 = arith.constant 6 : index
    %c0_79 = arith.constant 0 : index
    %c0_80 = arith.constant 0 : index
    %126 = vector.load %arg8[%c6, %c0_79, %c0_80] : memref<7x128x128xf32, #tpu.memory_space<vmem>>, vector<1x128x128xf32>
    %127 = vector.shape_cast %126 : vector<1x128x128xf32> to vector<128x128xf32>
    %cst_81 = arith.constant dense<0.000000e+00> : vector<8x128xf32>
    %128 = tpu.matmul %125, %127, %cst_81 {dimension_numbers = #tpu.dot_dimension_numbers<[1], [0], [0], [1], [0, 0, 1, 1], [], []>} : vector<8x128xf32>, vector<128x128xf32>, vector<8x128xf32> -> vector<8x128xf32>
    %c6_82 = arith.constant 6 : index
    %c0_83 = arith.constant 0 : index
    %c0_84 = arith.constant 0 : index
    %129 = vector.load %arg9[%c6_82, %c0_83, %c0_84] : memref<7x1x128xf32, #tpu.memory_space<vmem>>, vector<1x1x128xf32>
    %130 = vector.shape_cast %129 : vector<1x1x128xf32> to vector<1x128xf32>
    %131 = vector.broadcast %130 : vector<1x128xf32> to vector<8x128xf32>
    %132 = arith.addf %128, %131 : vector<8x128xf32>
    %cst_85 = arith.constant 0.000000e+00 : f32
    %133 = vector.broadcast %cst_85 : f32 to vector<8x128xf32>
    %134 = arith.cmpf oge, %132, %133 : vector<8x128xf32>
    %cst_86 = arith.constant 2.000000e-01 : f32
    %135 = vector.broadcast %cst_86 : f32 to vector<8x128xf32>
    %136 = arith.mulf %135, %132 : vector<8x128xf32>
    %137 = arith.select %134, %132, %136 : vector<8x128xi1>, vector<8x128xf32>
    %cst_87 = arith.constant 1.41421354 : f32
    %138 = vector.broadcast %cst_87 : f32 to vector<8x128xf32>
    %139 = arith.mulf %137, %138 : vector<8x128xf32>
    %c0_88 = arith.constant 0 : index
    %c0_89 = arith.constant 0 : index
    %140 = vector.load %arg10[%c0_88, %c0_89] : memref<8x128xf32, #tpu.memory_space<vmem>>, vector<8x128xf32>
    tpu.vector_store %arg10[%c0_88, %c0_89], %139 {strides = array<i32>} : memref<8x128xf32, #tpu.memory_space<vmem>>, vector<8x128xf32>,
    return
  }
  func.func @transform_0(%arg0: i32) -> (i32, i32) {
    %c0_i32 = arith.constant 0 : i32
    %c0_i32_0 = arith.constant 0 : i32
    return %arg0, %c0_i32 : i32, i32
  }
  func.func @transform_1(%arg0: i32) -> (i32, i32) {
    %c0_i32 = arith.constant 0 : i32
    %c0_i32_0 = arith.constant 0 : i32
    %c0_i32_1 = arith.constant 0 : i32
    return %c0_i32, %c0_i32_0 : i32, i32
  }
  func.func @transform_2(%arg0: i32) -> (i32, i32) {
    %c0_i32 = arith.constant 0 : i32
    %c0_i32_0 = arith.constant 0 : i32
    return %arg0, %c0_i32 : i32, i32
  }
  func.func @transform_3(%arg0: i32) -> (i32, i32) {
    %c0_i32 = arith.constant 0 : i32
    %c0_i32_0 = arith.constant 0 : i32
    %c0_i32_1 = arith.constant 0 : i32
    return %c0_i32, %c0_i32_0 : i32, i32
  }
  func.func @transform_4(%arg0: i32) -> (i32, i32) {
    %c0_i32 = arith.constant 0 : i32
    %c0_i32_0 = arith.constant 0 : i32
    %c0_i32_1 = arith.constant 0 : i32
    return %c0_i32, %c0_i32_0 : i32, i32
  }
  func.func @transform_5(%arg0: i32) -> (i32, i32) {
    %c0_i32 = arith.constant 0 : i32
    %c0_i32_0 = arith.constant 0 : i32
    %c0_i32_1 = arith.constant 0 : i32
    return %c0_i32, %c0_i32_0 : i32, i32
  }
  func.func @transform_6(%arg0: i32) -> (i32, i32) {
    %c0_i32 = arith.constant 0 : i32
    %c0_i32_0 = arith.constant 0 : i32
    %c0_i32_1 = arith.constant 0 : i32
    return %c0_i32, %c0_i32_0 : i32, i32
  }
  func.func @transform_7(%arg0: i32) -> (i32, i32, i32) {
    %c0_i32 = arith.constant 0 : i32
    %c0_i32_0 = arith.constant 0 : i32
    %c0_i32_1 = arith.constant 0 : i32
    %c0_i32_2 = arith.constant 0 : i32
    return %c0_i32, %c0_i32_0, %c0_i32_1 : i32, i32, i32
  }
  func.func @transform_8(%arg0: i32) -> (i32, i32, i32) {
    %c0_i32 = arith.constant 0 : i32
    %c0_i32_0 = arith.constant 0 : i32
    %c0_i32_1 = arith.constant 0 : i32
    %c0_i32_2 = arith.constant 0 : i32
    return %c0_i32, %c0_i32_0, %c0_i32_1 : i32, i32, i32
  }
  func.func @transform_9(%arg0: i32) -> (i32, i32) {
    %c0_i32 = arith.constant 0 : i32
    %c0_i32_0 = arith.constant 0 : i32
    return %arg0, %c0_i32 : i32, i32
  }
}

</mosaic_0001>

<llo_original>
// kernel: tpu_custom_call.1
$region0: #{tpu_custom_call.1}
  #allocation0 [shape = 'u32[]', space=smem, size = 0x4, offset = 0x4, fixed_abs, tag = 'smem constant byte address 0x4 - core index']
  #allocation1 [shape = 'u32[144,128]{1,0:T(1,128)}', space=vmem, size = 0x12000, scoped, tag = 'internal scratch']
  %s0 = inlined_call_operand.hbm [shape: f32[8,128], index: 0, kind: input, shape index: {}]
  %s1 = inlined_call_operand.hbm [shape: f32[128,128], index: 1, kind: input, shape index: {}]
  %s2 = inlined_call_operand.hbm [shape: f32[8,128], index: 2, kind: input, shape index: {}]
  %s3 = inlined_call_operand.hbm [shape: f32[128,128], index: 3, kind: input, shape index: {}]
  %s4 = inlined_call_operand.vmem [shape: f32[1,128], index: 4, kind: input, shape index: {}]
  %s5 = inlined_call_operand.hbm [shape: f32[128,128], index: 5, kind: input, shape index: {}]
  %s6 = inlined_call_operand.vmem [shape: f32[1,128], index: 6, kind: input, shape index: {}]
  %s7 = inlined_call_operand.hbm [shape: f32[7,128,128], index: 7, kind: input, shape index: {}]
  %s8 = inlined_call_operand.vmem [shape: f32[7,1,128], index: 8, kind: input, shape index: {}]
  %s9 = inlined_call_operand.hbm [shape: f32[8,128], index: 9, kind: output, shape index: {}]
  %s10 = sld [smem:[#allocation0]]
  $region70: #{tpu_custom_call.1} parent=0
    _
  %s12 = ssub.s32 1, %s10
  %s13 = scalar_select 0, %s12, %s10
  $region1: #{tpu_custom_call.1} parent=0
    #allocation2 [shape = 'u8[4096]{0}', space=vmem, size = 0x1000, scoped, tag = 'input window, operand 0, single buffered']
    #allocation3 [shape = 's32[1]{0}', space=sflag, size = 0x4, scoped, tag = 'scoped memory for tpu_custom_call.1']
    #allocation4 [shape = 's32[1]{0}', space=sflag, size = 0x4, scoped, tag = 'scoped memory for tpu_custom_call.1']
    #allocation5 [shape = 'u8[65536]{0}', space=vmem, size = 0x10000, scoped, tag = 'input window, operand 1, single buffered']
    #allocation6 [shape = 's32[1]{0}', space=sflag, size = 0x4, scoped, tag = 'scoped memory for tpu_custom_call.1']
    #allocation7 [shape = 'u8[4096]{0}', space=vmem, size = 0x1000, scoped, tag = 'input window, operand 2, single buffered']
    #allocation8 [shape = 'u8[65536]{0}', space=vmem, size = 0x10000, scoped, tag = 'input window, operand 3, single buffered']
    #allocation9 [shape = 's32[1]{0}', space=sflag, size = 0x4, scoped, tag = 'scoped memory for tpu_custom_call.1']
    #allocation10 [shape = 'u8[65536]{0}', space=vmem, size = 0x10000, scoped, tag = 'input window, operand 5, single buffered']
    #allocation11 [shape = 'u8[458752]{0}', space=vmem, size = 0x70000, scoped, tag = 'input window, operand 7, single buffered']
    #allocation12 [shape = 's32[1]{0}', space=sflag, size = 0x4, scoped, tag = 'scoped memory for tpu_custom_call.1']
    #allocation13 [shape = 'u8[4096]{0}', space=vmem, size = 0x1000, scoped, tag = 'output window, operand 0, single buffered']
    %14 = vsyncpa [#allocation3], 0
    %15 = vsyncpa [#allocation6], 0
    %16 = vsyncpa [#allocation9], 0
    %17 = vsyncpa [#allocation12], 0
    %18 = vsyncpa [#allocation4], 0
    // Predicated region
    $region2: #{tpu_custom_call.1} parent=1 // pred_check
      _
    $region3: #{tpu_custom_call.1} parent=1 // pred_check_branch
      %20 = sbr.rel (0) target = $region5
    $region4: #{tpu_custom_call.1} parent=1 // pred_region
      %s22 = ssub.s32 128, 128
      %23 = vsyncadd [#allocation3], %s22
      %s25 = sshll.u32 [#allocation2], 4
      %s26 = int_to_ptr.vmem [resolvable:$true] %s25
      %28 = dma.hbm_to_vmem [thread:$0]  %s0, 128, %s26, [#allocation3]
    $region5: #{tpu_custom_call.1} parent=1 // pred_fallthru
      _
    // Predicated region
    $region6: #{tpu_custom_call.1} parent=1 // pred_check
      _
    $region7: #{tpu_custom_call.1} parent=1 // pred_check_branch
      %30 = sbr.rel (0) target = $region9
    $region8: #{tpu_custom_call.1} parent=1 // pred_region
      %s32 = ssub.s32 2048, 2048
      %33 = vsyncadd [#allocation6], %s32
      %s34 = sshll.u32 [#allocation5], 4
      %s35 = int_to_ptr.vmem [resolvable:$true] %s34
      %40 = dma.hbm_to_vmem [thread:$0]  %s1, 2048, %s35, [#allocation6], 128, 128, 8
    $region9: #{tpu_custom_call.1} parent=1 // pred_fallthru
      _
    // Predicated region
    $region10: #{tpu_custom_call.1} parent=1 // pred_check
      _
    $region11: #{tpu_custom_call.1} parent=1 // pred_check_branch
      %42 = sbr.rel (0) target = $region13
    $region12: #{tpu_custom_call.1} parent=1 // pred_region
      %s44 = ssub.s32 128, 128
      %45 = vsyncadd [#allocation6], %s44
      %s47 = sshll.u32 [#allocation7], 4
      %s48 = int_to_ptr.vmem [resolvable:$true] %s47
      %50 = dma.hbm_to_vmem [thread:$0]  %s2, 128, %s48, [#allocation6]
    $region13: #{tpu_custom_call.1} parent=1 // pred_fallthru
      _
    // Predicated region
    $region14: #{tpu_custom_call.1} parent=1 // pred_check
      _
    $region15: #{tpu_custom_call.1} parent=1 // pred_check_branch
      %52 = sbr.rel (0) target = $region17
    $region16: #{tpu_custom_call.1} parent=1 // pred_region
      %s54 = ssub.s32 2048, 2048
      %55 = vsyncadd [#allocation9], %s54
      %s56 = sshll.u32 [#allocation8], 4
      %s57 = int_to_ptr.vmem [resolvable:$true] %s56
      %62 = dma.hbm_to_vmem [thread:$0]  %s3, 2048, %s57, [#allocation9], 128, 128, 8
    $region17: #{tpu_custom_call.1} parent=1 // pred_fallthru
      _
    // Predicated region
    $region18: #{tpu_custom_call.1} parent=1 // pred_check
      _
    $region19: #{tpu_custom_call.1} parent=1 // pred_check_branch
      %64 = sbr.rel (0) target = $region21
    $region20: #{tpu_custom_call.1} parent=1 // pred_region
      _
    $region21: #{tpu_custom_call.1} parent=1 // pred_fallthru
      _
    // Predicated region
    $region22: #{tpu_custom_call.1} parent=1 // pred_check
      _
    $region23: #{tpu_custom_call.1} parent=1 // pred_check_branch
      %66 = sbr.rel (0) target = $region25
    $region24: #{tpu_custom_call.1} parent=1 // pred_region
      %s68 = ssub.s32 2048, 2048
      %69 = vsyncadd [#allocation9], %s68
      %s70 = sshll.u32 [#allocation10], 4
      %s71 = int_to_ptr.vmem [resolvable:$true] %s70
      %76 = dma.hbm_to_vmem [thread:$0]  %s5, 2048, %s71, [#allocation9], 128, 128, 8
    $region25: #{tpu_custom_call.1} parent=1 // pred_fallthru
      _
    // Predicated region
    $region26: #{tpu_custom_call.1} parent=1 // pred_check
      _
    $region27: #{tpu_custom_call.1} parent=1 // pred_check_branch
      %78 = sbr.rel (0) target = $region29
    $region28: #{tpu_custom_call.1} parent=1 // pred_region
      _
    $region29: #{tpu_custom_call.1} parent=1 // pred_fallthru
      _
    // Predicated region
    $region30: #{tpu_custom_call.1} parent=1 // pred_check
      _
    $region31: #{tpu_custom_call.1} parent=1 // pred_check_branch
      %80 = sbr.rel (0) target = $region33
    $region32: #{tpu_custom_call.1} parent=1 // pred_region
      %s82 = ssub.s32 14336, 14336
      %83 = vsyncadd [#allocation12], %s82
      %s84 = sshll.u32 [#allocation11], 4
      %s85 = int_to_ptr.vmem [resolvable:$true] %s84
      %90 = dma.hbm_to_vmem [thread:$0]  %s7, 14336, %s85, [#allocation12], 128, 128, 8
    $region33: #{tpu_custom_call.1} parent=1 // pred_fallthru
      _
    // Predicated region
    $region34: #{tpu_custom_call.1} parent=1 // pred_check
      _
    $region35: #{tpu_custom_call.1} parent=1 // pred_check_branch
      %92 = sbr.rel (0) target = $region37
    $region36: #{tpu_custom_call.1} parent=1 // pred_region
      _
    $region37: #{tpu_custom_call.1} parent=1 // pred_fallthru
      _
    // Predicated region
    $region38: #{tpu_custom_call.1} parent=1 // pred_check
      _
    $region39: #{tpu_custom_call.1} parent=1 // pred_check_branch
      %94 = sbr.rel (0) target = $region41
    $region40: #{tpu_custom_call.1} parent=1 // pred_region
      %95 = dma.done [#allocation3], 128
    $region41: #{tpu_custom_call.1} parent=1 // pred_fallthru
      _
    // Predicated region
    $region42: #{tpu_custom_call.1} parent=1 // pred_check
      _
    $region43: #{tpu_custom_call.1} parent=1 // pred_check_branch
      %97 = sbr.rel (0) target = $region45
    $region44: #{tpu_custom_call.1} parent=1 // pred_region
      %98 = dma.done [#allocation6], 2048
    $region45: #{tpu_custom_call.1} parent=1 // pred_fallthru
      _
    // Predicated region
    $region46: #{tpu_custom_call.1} parent=1 // pred_check
      _
    $region47: #{tpu_custom_call.1} parent=1 // pred_check_branch
      %100 = sbr.rel (0) target = $region49
    $region48: #{tpu_custom_call.1} parent=1 // pred_region
      %101 = dma.done [#allocation6], 128
    $region49: #{tpu_custom_call.1} parent=1 // pred_fallthru
      _
    // Predicated region
    $region50: #{tpu_custom_call.1} parent=1 // pred_check
      _
    $region51: #{tpu_custom_call.1} parent=1 // pred_check_branch
      %103 = sbr.rel (0) target = $region53
    $region52: #{tpu_custom_call.1} parent=1 // pred_region
      %104 = dma.done [#allocation9], 2048
    $region53: #{tpu_custom_call.1} parent=1 // pred_fallthru
      _
    // Predicated region
    $region54: #{tpu_custom_call.1} parent=1 // pred_check
      _
    $region55: #{tpu_custom_call.1} parent=1 // pred_check_branch
      %106 = sbr.rel (0) target = $region57
    $region56: #{tpu_custom_call.1} parent=1 // pred_region
      %107 = dma.done [#allocation9], 2048
    $region57: #{tpu_custom_call.1} parent=1 // pred_fallthru
      _
    // Predicated region
    $region58: #{tpu_custom_call.1} parent=1 // pred_check
      _
    $region59: #{tpu_custom_call.1} parent=1 // pred_check_branch
      %109 = sbr.rel (0) target = $region61
    $region60: #{tpu_custom_call.1} parent=1 // pred_region
      %110 = dma.done [#allocation12], 14336
    $region61: #{tpu_custom_call.1} parent=1 // pred_fallthru
      _
    %v111 = vld [vmem:[#allocation2] sm:$0xff]
    %v112 = vmul.f32 %v111, %v111
    %113 = vadd.xlane.f32.xlu0 %v112
    %v114 = vpop.xlane.xlu0 %113
    %v115 = vmul.f32 %v114, 0.03125
    %v116 = vadd.f32 %v115, 1e-08
    %v117 = vrsqrt.pop %v116
    %v118 = vmul.f32 %v111, %v117
    %v119 = vld [vmem:[#allocation5] sm:$0xff]
    %v120 = vld [vmem:[#allocation5 + $0x8] sm:$0xff]
    %v121 = vld [vmem:[#allocation5 + $0x10] sm:$0xff]
    %v122 = vld [vmem:[#allocation5 + $0x18] sm:$0xff]
    %v123 = vld [vmem:[#allocation5 + $0x20] sm:$0xff]
    %v124 = vld [vmem:[#allocation5 + $0x28] sm:$0xff]
    %v125 = vld [vmem:[#allocation5 + $0x30] sm:$0xff]
    %v126 = vld [vmem:[#allocation5 + $0x38] sm:$0xff]
    %v127 = vld [vmem:[#allocation5 + $0x40] sm:$0xff]
    %v128 = vld [vmem:[#allocation5 + $0x48] sm:$0xff]
    %v129 = vld [vmem:[#allocation5 + $0x50] sm:$0xff]
    %v130 = vld [vmem:[#allocation5 + $0x58] sm:$0xff]
    %v131 = vld [vmem:[#allocation5 + $0x60] sm:$0xff]
    %v132 = vld [vmem:[#allocation5 + $0x68] sm:$0xff]
    %v133 = vld [vmem:[#allocation5 + $0x70] sm:$0xff]
    %v134 = vld [vmem:[#allocation5 + $0x78] sm:$0xff]
    %v135 = vld [vmem:[#allocation7] sm:$0xff]
    %v136 = vld [vmem:[#allocation8] sm:$0xff]
    %v137 = vld [vmem:[#allocation8 + $0x8] sm:$0xff]
    %v138 = vld [vmem:[#allocation8 + $0x10] sm:$0xff]
    %v139 = vld [vmem:[#allocation8 + $0x18] sm:$0xff]
    %v140 = vld [vmem:[#allocation8 + $0x20] sm:$0xff]
    %v141 = vld [vmem:[#allocation8 + $0x28] sm:$0xff]
    %v142 = vld [vmem:[#allocation8 + $0x30] sm:$0xff]
    %v143 = vld [vmem:[#allocation8 + $0x38] sm:$0xff]
    %v144 = vld [vmem:[#allocation8 + $0x40] sm:$0xff]
    %v145 = vld [vmem:[#allocation8 + $0x48] sm:$0xff]
    %v146 = vld [vmem:[#allocation8 + $0x50] sm:$0xff]
    %v147 = vld [vmem:[#allocation8 + $0x58] sm:$0xff]
    %v148 = vld [vmem:[#allocation8 + $0x60] sm:$0xff]
    %v149 = vld [vmem:[#allocation8 + $0x68] sm:$0xff]
    %v150 = vld [vmem:[#allocation8 + $0x70] sm:$0xff]
    %v151 = vld [vmem:[#allocation8 + $0x78] sm:$0xff]
    %v152 = vld [vmem:[%s4] sm:$0x1]
    %v154 = vlaneseq
    %v155 = vshrl.u32 %v154, 7
    %v156 = vsub.s32 0, %v155
    %v157 = vrot.slane %v152, %v156
    %159 = vmatprep.subr.mxu0 0.0
    %160 = vmatpush1.msra.mxu0 %v136
    %161 = vmatprep.subr.mxu0 0.0
    %162 = vmatpush1.msra.mxu0 %v137
    %163 = vmatprep.subr.mxu0 0.0
    %164 = vmatpush1.msra.mxu0 %v138
    %165 = vmatprep.subr.mxu0 0.0
    %166 = vmatpush1.msra.mxu0 %v139
    %167 = vmatprep.subr.mxu0 0.0
    %168 = vmatpush1.msra.mxu0 %v140
    %169 = vmatprep.subr.mxu0 0.0
    %170 = vmatpush1.msra.mxu0 %v141
    %171 = vmatprep.subr.mxu0 0.0
    %172 = vmatpush1.msra.mxu0 %v142
    %173 = vmatprep.subr.mxu0 0.0
    %174 = vmatpush1.msra.mxu0 %v143
    %175 = vmatprep.subr.mxu0 0.0
    %176 = vmatpush1.msra.mxu0 %v144
    %177 = vmatprep.subr.mxu0 0.0
    %178 = vmatpush1.msra.mxu0 %v145
    %179 = vmatprep.subr.mxu0 0.0
    %180 = vmatpush1.msra.mxu0 %v146
    %181 = vmatprep.subr.mxu0 0.0
    %182 = vmatpush1.msra.mxu0 %v147
    %183 = vmatprep.subr.mxu0 0.0
    %184 = vmatpush1.msra.mxu0 %v148
    %185 = vmatprep.subr.mxu0 0.0
    %186 = vmatpush1.msra.mxu0 %v149
    %187 = vmatprep.subr.mxu0 0.0
    %188 = vmatpush1.msra.mxu0 %v150
    %189 = vmatprep.subr.mxu0 0.0
    %190 = vmatpush1.msra.mxu0 %v151
    %191 = vmatprep.subr.mxu0 0.0
    %192 = vmatpush1.msra.mxu0 0.0
    %193 = vmatprep.subr.mxu0 0.0
    %194 = vmatpush1.msra.mxu0 0.0
    %195 = vmatprep.subr.mxu0 0.0
    %196 = vmatpush1.msra.mxu0 0.0
    %197 = vmatprep.subr.mxu0 0.0
    %198 = vmatpush1.msra.mxu0 0.0
    %199 = vmatprep.subr.mxu0 0.0
    %200 = vmatpush1.msra.mxu0 0.0
    %201 = vmatprep.subr.mxu0 0.0
    %202 = vmatpush1.msra.mxu0 0.0
    %203 = vmatprep.subr.mxu0 0.0
    %204 = vmatpush1.msra.mxu0 0.0
    %205 = vmatprep.subr.mxu0 0.0
    %206 = vmatpush1.msra.mxu0 0.0
    %207 = vmatprep.subr.mxu0 0.0
    %208 = vmatpush1.msra.mxu0 0.0
    %209 = vmatprep.subr.mxu0 0.0
    %210 = vmatpush1.msra.mxu0 0.0
    %211 = vmatprep.subr.mxu0 0.0
    %212 = vmatpush1.msra.mxu0 0.0
    %213 = vmatprep.subr.mxu0 0.0
    %214 = vmatpush1.msra.mxu0 0.0
    %215 = vmatprep.subr.mxu0 0.0
    %216 = vmatpush1.msra.mxu0 0.0
    %217 = vmatprep.subr.mxu0 0.0
    %218 = vmatpush1.msra.mxu0 0.0
    %219 = vmatprep.subr.mxu0 0.0
    %220 = vmatpush1.msra.mxu0 0.0
    %221 = vmatprep.subr.mxu0 0.0
    %222 = vmatpush1.msra.mxu0 0.0
    %223 = vmatprep.mubr.f32.mxu0 0.0
    %224 = vmatmul.mubr.f32.gmra.mrb[0].mxu0 %v135
    %v225 = vpop.f32.mrb[0].mxu0
    %v226 = vadd.f32 %v157, %v225
    %v227 = vpop.f32.mrb[0].mxu0
    %228 = vdwg.mxu0
    %v229 = vmul.f32 %v226, %v226
    %230 = vadd.xlane.f32.xlu0 %v229
    %v231 = vpop.xlane.xlu0 %230
    %v232 = vmul.f32 %v231, 0.03125
    %v233 = vadd.f32 %v232, 1e-08
    %v234 = vrsqrt.pop %v233
    %v235 = vmul.f32 %v226, %v234
    %v236 = vld [vmem:[#allocation10] sm:$0xff]
    %v237 = vld [vmem:[#allocation10 + $0x8] sm:$0xff]
    %v238 = vld [vmem:[#allocation10 + $0x10] sm:$0xff]
    %v239 = vld [vmem:[#allocation10 + $0x18] sm:$0xff]
    %v240 = vld [vmem:[#allocation10 + $0x20] sm:$0xff]
    %v241 = vld [vmem:[#allocation10 + $0x28] sm:$0xff]
    %v242 = vld [vmem:[#allocation10 + $0x30] sm:$0xff]
    %v243 = vld [vmem:[#allocation10 + $0x38] sm:$0xff]
    %v244 = vld [vmem:[#allocation10 + $0x40] sm:$0xff]
    %v245 = vld [vmem:[#allocation10 + $0x48] sm:$0xff]
    %v246 = vld [vmem:[#allocation10 + $0x50] sm:$0xff]
    %v247 = vld [vmem:[#allocation10 + $0x58] sm:$0xff]
    %v248 = vld [vmem:[#allocation10 + $0x60] sm:$0xff]
    %v249 = vld [vmem:[#allocation10 + $0x68] sm:$0xff]
    %v250 = vld [vmem:[#allocation10 + $0x70] sm:$0xff]
    %v251 = vld [vmem:[#allocation10 + $0x78] sm:$0xff]
    %252 = vmatprep.subr.mxu0 0.0
    %253 = vmatpush1.msra.mxu0 %v236
    %254 = vmatprep.subr.mxu0 0.0
    %255 = vmatpush1.msra.mxu0 %v237
    %256 = vmatprep.subr.mxu0 0.0
    %257 = vmatpush1.msra.mxu0 %v238
    %258 = vmatprep.subr.mxu0 0.0
    %259 = vmatpush1.msra.mxu0 %v239
    %260 = vmatprep.subr.mxu0 0.0
    %261 = vmatpush1.msra.mxu0 %v240
    %262 = vmatprep.subr.mxu0 0.0
    %263 = vmatpush1.msra.mxu0 %v241
    %264 = vmatprep.subr.mxu0 0.0
    %265 = vmatpush1.msra.mxu0 %v242
    %266 = vmatprep.subr.mxu0 0.0
    %267 = vmatpush1.msra.mxu0 %v243
    %268 = vmatprep.subr.mxu0 0.0
    %269 = vmatpush1.msra.mxu0 %v244
    %270 = vmatprep.subr.mxu0 0.0
    %271 = vmatpush1.msra.mxu0 %v245
    %272 = vmatprep.subr.mxu0 0.0
    %273 = vmatpush1.msra.mxu0 %v246
    %274 = vmatprep.subr.mxu0 0.0
    %275 = vmatpush1.msra.mxu0 %v247
    %276 = vmatprep.subr.mxu0 0.0
    %277 = vmatpush1.msra.mxu0 %v248
    %278 = vmatprep.subr.mxu0 0.0
    %279 = vmatpush1.msra.mxu0 %v249
    %280 = vmatprep.subr.mxu0 0.0
    %281 = vmatpush1.msra.mxu0 %v250
    %282 = vmatprep.subr.mxu0 0.0
    %283 = vmatpush1.msra.mxu0 %v251
    %284 = vmatprep.subr.mxu0 0.0
    %285 = vmatpush1.msra.mxu0 0.0
    %286 = vmatprep.subr.mxu0 0.0
    %287 = vmatpush1.msra.mxu0 0.0
    %288 = vmatprep.subr.mxu0 0.0
    %289 = vmatpush1.msra.mxu0 0.0
    %290 = vmatprep.subr.mxu0 0.0
    %291 = vmatpush1.msra.mxu0 0.0
    %292 = vmatprep.subr.mxu0 0.0
    %293 = vmatpush1.msra.mxu0 0.0
    %294 = vmatprep.subr.mxu0 0.0
    %295 = vmatpush1.msra.mxu0 0.0
    %296 = vmatprep.subr.mxu0 0.0
    %297 = vmatpush1.msra.mxu0 0.0
    %298 = vmatprep.subr.mxu0 0.0
    %299 = vmatpush1.msra.mxu0 0.0
    %300 = vmatprep.subr.mxu0 0.0
    %301 = vmatpush1.msra.mxu0 0.0
    %302 = vmatprep.subr.mxu0 0.0
    %303 = vmatpush1.msra.mxu0 0.0
    %304 = vmatprep.subr.mxu0 0.0
    %305 = vmatpush1.msra.mxu0 0.0
    %306 = vmatprep.subr.mxu0 0.0
    %307 = vmatpush1.msra.mxu0 0.0
    %308 = vmatprep.subr.mxu0 0.0
    %309 = vmatpush1.msra.mxu0 0.0
    %310 = vmatprep.subr.mxu0 0.0
    %311 = vmatpush1.msra.mxu0 0.0
    %312 = vmatprep.subr.mxu0 0.0
    %313 = vmatpush1.msra.mxu0 0.0
    %314 = vmatprep.subr.mxu0 0.0
    %315 = vmatpush1.msra.mxu0 0.0
    %316 = vmatprep.mubr.f32.mxu0 0.0
    %317 = vmatmul.mubr.f32.gmra.mrb[0].mxu0 %v235
    %v318 = vpop.f32.mrb[0].mxu0
    %v319 = vadd.f32 0.0, %v318
    %v320 = vpop.f32.mrb[0].mxu0
    %321 = vdwg.mxu0
    %322 = vmatprep.subr.mxu0 0.0
    %323 = vmatpush1.msra.mxu0 %v119
    %324 = vmatprep.subr.mxu0 0.0
    %325 = vmatpush1.msra.mxu0 %v120
    %326 = vmatprep.subr.mxu0 0.0
    %327 = vmatpush1.msra.mxu0 %v121
    %328 = vmatprep.subr.mxu0 0.0
    %329 = vmatpush1.msra.mxu0 %v122
    %330 = vmatprep.subr.mxu0 0.0
    %331 = vmatpush1.msra.mxu0 %v123
    %332 = vmatprep.subr.mxu0 0.0
    %333 = vmatpush1.msra.mxu0 %v124
    %334 = vmatprep.subr.mxu0 0.0
    %335 = vmatpush1.msra.mxu0 %v125
    %336 = vmatprep.subr.mxu0 0.0
    %337 = vmatpush1.msra.mxu0 %v126
    %338 = vmatprep.subr.mxu0 0.0
    %339 = vmatpush1.msra.mxu0 %v127
    %340 = vmatprep.subr.mxu0 0.0
    %341 = vmatpush1.msra.mxu0 %v128
    %342 = vmatprep.subr.mxu0 0.0
    %343 = vmatpush1.msra.mxu0 %v129
    %344 = vmatprep.subr.mxu0 0.0
    %345 = vmatpush1.msra.mxu0 %v130
    %346 = vmatprep.subr.mxu0 0.0
    %347 = vmatpush1.msra.mxu0 %v131
    %348 = vmatprep.subr.mxu0 0.0
    %349 = vmatpush1.msra.mxu0 %v132
    %350 = vmatprep.subr.mxu0 0.0
    %351 = vmatpush1.msra.mxu0 %v133
    %352 = vmatprep.subr.mxu0 0.0
    %353 = vmatpush1.msra.mxu0 %v134
    %354 = vmatprep.subr.mxu0 0.0
    %355 = vmatpush1.msra.mxu0 0.0
    %356 = vmatprep.subr.mxu0 0.0
    %357 = vmatpush1.msra.mxu0 0.0
    %358 = vmatprep.subr.mxu0 0.0
    %359 = vmatpush1.msra.mxu0 0.0
    %360 = vmatprep.subr.mxu0 0.0
    %361 = vmatpush1.msra.mxu0 0.0
    %362 = vmatprep.subr.mxu0 0.0
    %363 = vmatpush1.msra.mxu0 0.0
    %364 = vmatprep.subr.mxu0 0.0
    %365 = vmatpush1.msra.mxu0 0.0
    %366 = vmatprep.subr.mxu0 0.0
    %367 = vmatpush1.msra.mxu0 0.0
    %368 = vmatprep.subr.mxu0 0.0
    %369 = vmatpush1.msra.mxu0 0.0
    %370 = vmatprep.subr.mxu0 0.0
    %371 = vmatpush1.msra.mxu0 0.0
    %372 = vmatprep.subr.mxu0 0.0
    %373 = vmatpush1.msra.mxu0 0.0
    %374 = vmatprep.subr.mxu0 0.0
    %375 = vmatpush1.msra.mxu0 0.0
    %376 = vmatprep.subr.mxu0 0.0
    %377 = vmatpush1.msra.mxu0 0.0
    %378 = vmatprep.subr.mxu0 0.0
    %379 = vmatpush1.msra.mxu0 0.0
    %380 = vmatprep.subr.mxu0 0.0
    %381 = vmatpush1.msra.mxu0 0.0
    %382 = vmatprep.subr.mxu0 0.0
    %383 = vmatpush1.msra.mxu0 0.0
    %384 = vmatprep.subr.mxu0 0.0
    %385 = vmatpush1.msra.mxu0 0.0
    %386 = vmatprep.mubr.f32.mxu0 0.0
    %387 = vmatmul.mubr.f32.gmra.mrb[0].mxu0 %v118
    %v388 = vpop.f32.mrb[0].mxu0
    %v389 = vadd.f32 %v319, %v388
    %v390 = vpop.f32.mrb[0].mxu0
    %391 = vdwg.mxu0
    %v392 = vld [vmem:[%s6] sm:$0x1]
    %v394 = vlaneseq
    %v395 = vshrl.u32 %v394, 7
    %v396 = vsub.s32 0, %v395
    %v397 = vrot.slane %v392, %v396
    %v399 = vadd.f32 %v389, %v397
    %vm400 = vcmp.ge.f32.partialorder %v399, 0.0
    %v401 = vmul.f32 %v399, 0.2
    %v402 = vsel %vm400, %v399, %v401
    %v403 = vmul.f32 %v402, 1.4142135
    %v404 = vld [vmem:[#allocation11] sm:$0xff]
    %v405 = vld [vmem:[#allocation11 + $0x8] sm:$0xff]
    %v406 = vld [vmem:[#allocation11 + $0x10] sm:$0xff]
    %v407 = vld [vmem:[#allocation11 + $0x18] sm:$0xff]
    %v408 = vld [vmem:[#allocation11 + $0x20] sm:$0xff]
    %v409 = vld [vmem:[#allocation11 + $0x28] sm:$0xff]
    %v410 = vld [vmem:[#allocation11 + $0x30] sm:$0xff]
    %v411 = vld [vmem:[#allocation11 + $0x38] sm:$0xff]
    %v412 = vld [vmem:[#allocation11 + $0x40] sm:$0xff]
    %v413 = vld [vmem:[#allocation11 + $0x48] sm:$0xff]
    %v414 = vld [vmem:[#allocation11 + $0x50] sm:$0xff]
    %v415 = vld [vmem:[#allocation11 + $0x58] sm:$0xff]
    %v416 = vld [vmem:[#allocation11 + $0x60] sm:$0xff]
    %v417 = vld [vmem:[#allocation11 + $0x68] sm:$0xff]
    %v418 = vld [vmem:[#allocation11 + $0x70] sm:$0xff]
    %v419 = vld [vmem:[#allocation11 + $0x78] sm:$0xff]
    %v420 = vld [vmem:[%s8] sm:$0x1]
    %v422 = vlaneseq
    %v423 = vshrl.u32 %v422, 7
    %v424 = vsub.s32 0, %v423
    %v425 = vrot.slane %v420, %v424
    %427 = vmatprep.subr.mxu0 0.0
    %428 = vmatpush1.msra.mxu0 %v404
    %429 = vmatprep.subr.mxu0 0.0
    %430 = vmatpush1.msra.mxu0 %v405
    %431 = vmatprep.subr.mxu0 0.0
    %432 = vmatpush1.msra.mxu0 %v406
    %433 = vmatprep.subr.mxu0 0.0
    %434 = vmatpush1.msra.mxu0 %v407
    %435 = vmatprep.subr.mxu0 0.0
    %436 = vmatpush1.msra.mxu0 %v408
    %437 = vmatprep.subr.mxu0 0.0
    %438 = vmatpush1.msra.mxu0 %v409
    %439 = vmatprep.subr.mxu0 0.0
    %440 = vmatpush1.msra.mxu0 %v410
    %441 = vmatprep.subr.mxu0 0.0
    %442 = vmatpush1.msra.mxu0 %v411
    %443 = vmatprep.subr.mxu0 0.0
    %444 = vmatpush1.msra.mxu0 %v412
    %445 = vmatprep.subr.mxu0 0.0
    %446 = vmatpush1.msra.mxu0 %v413
    %447 = vmatprep.subr.mxu0 0.0
    %448 = vmatpush1.msra.mxu0 %v414
    %449 = vmatprep.subr.mxu0 0.0
    %450 = vmatpush1.msra.mxu0 %v415
    %451 = vmatprep.subr.mxu0 0.0
    %452 = vmatpush1.msra.mxu0 %v416
    %453 = vmatprep.subr.mxu0 0.0
    %454 = vmatpush1.msra.mxu0 %v417
    %455 = vmatprep.subr.mxu0 0.0
    %456 = vmatpush1.msra.mxu0 %v418
    %457 = vmatprep.subr.mxu0 0.0
    %458 = vmatpush1.msra.mxu0 %v419
    %459 = vmatprep.subr.mxu0 0.0
    %460 = vmatpush1.msra.mxu0 0.0
    %461 = vmatprep.subr.mxu0 0.0
    %462 = vmatpush1.msra.mxu0 0.0
    %463 = vmatprep.subr.mxu0 0.0
    %464 = vmatpush1.msra.mxu0 0.0
    %465 = vmatprep.subr.mxu0 0.0
    %466 = vmatpush1.msra.mxu0 0.0
    %467 = vmatprep.subr.mxu0 0.0
    %468 = vmatpush1.msra.mxu0 0.0
    %469 = vmatprep.subr.mxu0 0.0
    %470 = vmatpush1.msra.mxu0 0.0
    %471 = vmatprep.subr.mxu0 0.0
    %472 = vmatpush1.msra.mxu0 0.0
    %473 = vmatprep.subr.mxu0 0.0
    %474 = vmatpush1.msra.mxu0 0.0
    %475 = vmatprep.subr.mxu0 0.0
    %476 = vmatpush1.msra.mxu0 0.0
    %477 = vmatprep.subr.mxu0 0.0
    %478 = vmatpush1.msra.mxu0 0.0
    %479 = vmatprep.subr.mxu0 0.0
    %480 = vmatpush1.msra.mxu0 0.0
    %481 = vmatprep.subr.mxu0 0.0
    %482 = vmatpush1.msra.mxu0 0.0
    %483 = vmatprep.subr.mxu0 0.0
    %484 = vmatpush1.msra.mxu0 0.0
    %485 = vmatprep.subr.mxu0 0.0
    %486 = vmatpush1.msra.mxu0 0.0
    %487 = vmatprep.subr.mxu0 0.0
    %488 = vmatpush1.msra.mxu0 0.0
    %489 = vmatprep.subr.mxu0 0.0
    %490 = vmatpush1.msra.mxu0 0.0
    %491 = vmatprep.mubr.f32.mxu0 0.0
    %492 = vmatmul.mubr.f32.gmra.mrb[0].mxu0 %v403
    %v493 = vpop.f32.mrb[0].mxu0
    %v494 = vadd.f32 %v425, %v493
    %v495 = vpop.f32.mrb[0].mxu0
    %496 = vdwg.mxu0
    %vm497 = vcmp.ge.f32.partialorder %v494, 0.0
    %v498 = vmul.f32 %v494, 0.2
    %v499 = vsel %vm497, %v494, %v498
    %v500 = vmul.f32 %v499, 1.4142135
    %s501 = scalar_lea.vmem [#allocation11], 128
    %v502 = vld [vmem:[%s501] sm:$0xff]
    %v503 = vld [vmem:[%s501 + $0x8] sm:$0xff]
    %v504 = vld [vmem:[%s501 + $0x10] sm:$0xff]
    %v505 = vld [vmem:[%s501 + $0x18] sm:$0xff]
    %v506 = vld [vmem:[%s501 + $0x20] sm:$0xff]
    %v507 = vld [vmem:[%s501 + $0x28] sm:$0xff]
    %v508 = vld [vmem:[%s501 + $0x30] sm:$0xff]
    %v509 = vld [vmem:[%s501 + $0x38] sm:$0xff]
    %v510 = vld [vmem:[%s501 + $0x40] sm:$0xff]
    %v511 = vld [vmem:[%s501 + $0x48] sm:$0xff]
    %v512 = vld [vmem:[%s501 + $0x50] sm:$0xff]
    %v513 = vld [vmem:[%s501 + $0x58] sm:$0xff]
    %v514 = vld [vmem:[%s501 + $0x60] sm:$0xff]
    %v515 = vld [vmem:[%s501 + $0x68] sm:$0xff]
    %v516 = vld [vmem:[%s501 + $0x70] sm:$0xff]
    %v517 = vld [vmem:[%s501 + $0x78] sm:$0xff]
    %s518 = scalar_lea.vmem %s8, 1
    %v519 = vld [vmem:[%s518] sm:$0x1]
    %v521 = vlaneseq
    %v522 = vshrl.u32 %v521, 7
    %v523 = vsub.s32 0, %v522
    %v524 = vrot.slane %v519, %v523
    %526 = vmatprep.subr.mxu0 0.0
    %527 = vmatpush1.msra.mxu0 %v502
    %528 = vmatprep.subr.mxu0 0.0
    %529 = vmatpush1.msra.mxu0 %v503
    %530 = vmatprep.subr.mxu0 0.0
    %531 = vmatpush1.msra.mxu0 %v504
    %532 = vmatprep.subr.mxu0 0.0
    %533 = vmatpush1.msra.mxu0 %v505
    %534 = vmatprep.subr.mxu0 0.0
    %535 = vmatpush1.msra.mxu0 %v506
    %536 = vmatprep.subr.mxu0 0.0
    %537 = vmatpush1.msra.mxu0 %v507
    %538 = vmatprep.subr.mxu0 0.0
    %539 = vmatpush1.msra.mxu0 %v508
    %540 = vmatprep.subr.mxu0 0.0
    %541 = vmatpush1.msra.mxu0 %v509
    %542 = vmatprep.subr.mxu0 0.0
    %543 = vmatpush1.msra.mxu0 %v510
    %544 = vmatprep.subr.mxu0 0.0
    %545 = vmatpush1.msra.mxu0 %v511
    %546 = vmatprep.subr.mxu0 0.0
    %547 = vmatpush1.msra.mxu0 %v512
    %548 = vmatprep.subr.mxu0 0.0
    %549 = vmatpush1.msra.mxu0 %v513
    %550 = vmatprep.subr.mxu0 0.0
    %551 = vmatpush1.msra.mxu0 %v514
    %552 = vmatprep.subr.mxu0 0.0
    %553 = vmatpush1.msra.mxu0 %v515
    %554 = vmatprep.subr.mxu0 0.0
    %555 = vmatpush1.msra.mxu0 %v516
    %556 = vmatprep.subr.mxu0 0.0
    %557 = vmatpush1.msra.mxu0 %v517
    %558 = vmatprep.subr.mxu0 0.0
    %559 = vmatpush1.msra.mxu0 0.0
    %560 = vmatprep.subr.mxu0 0.0
    %561 = vmatpush1.msra.mxu0 0.0
    %562 = vmatprep.subr.mxu0 0.0
    %563 = vmatpush1.msra.mxu0 0.0
    %564 = vmatprep.subr.mxu0 0.0
    %565 = vmatpush1.msra.mxu0 0.0
    %566 = vmatprep.subr.mxu0 0.0
    %567 = vmatpush1.msra.mxu0 0.0
    %568 = vmatprep.subr.mxu0 0.0
    %569 = vmatpush1.msra.mxu0 0.0
    %570 = vmatprep.subr.mxu0 0.0
    %571 = vmatpush1.msra.mxu0 0.0
    %572 = vmatprep.subr.mxu0 0.0
    %573 = vmatpush1.msra.mxu0 0.0
    %574 = vmatprep.subr.mxu0 0.0
    %575 = vmatpush1.msra.mxu0 0.0
    %576 = vmatprep.subr.mxu0 0.0
    %577 = vmatpush1.msra.mxu0 0.0
    %578 = vmatprep.subr.mxu0 0.0
    %579 = vmatpush1.msra.mxu0 0.0
    %580 = vmatprep.subr.mxu0 0.0
    %581 = vmatpush1.msra.mxu0 0.0
    %582 = vmatprep.subr.mxu0 0.0
    %583 = vmatpush1.msra.mxu0 0.0
    %584 = vmatprep.subr.mxu0 0.0
    %585 = vmatpush1.msra.mxu0 0.0
    %586 = vmatprep.subr.mxu0 0.0
    %587 = vmatpush1.msra.mxu0 0.0
    %588 = vmatprep.subr.mxu0 0.0
    %589 = vmatpush1.msra.mxu0 0.0
    %590 = vmatprep.mubr.f32.mxu0 0.0
    %591 = vmatmul.mubr.f32.gmra.mrb[0].mxu0 %v500
    %v592 = vpop.f32.mrb[0].mxu0
    %v593 = vadd.f32 %v524, %v592
    %v594 = vpop.f32.mrb[0].mxu0
    %595 = vdwg.mxu0
    %vm596 = vcmp.ge.f32.partialorder %v593, 0.0
    %v597 = vmul.f32 %v593, 0.2
    %v598 = vsel %vm596, %v593, %v597
    %v599 = vmul.f32 %v598, 1.4142135
    %s600 = scalar_lea.vmem [#allocation11], 256
    %v601 = vld [vmem:[%s600] sm:$0xff]
    %v602 = vld [vmem:[%s600 + $0x8] sm:$0xff]
    %v603 = vld [vmem:[%s600 + $0x10] sm:$0xff]
    %v604 = vld [vmem:[%s600 + $0x18] sm:$0xff]
    %v605 = vld [vmem:[%s600 + $0x20] sm:$0xff]
    %v606 = vld [vmem:[%s600 + $0x28] sm:$0xff]
    %v607 = vld [vmem:[%s600 + $0x30] sm:$0xff]
    %v608 = vld [vmem:[%s600 + $0x38] sm:$0xff]
    %v609 = vld [vmem:[%s600 + $0x40] sm:$0xff]
    %v610 = vld [vmem:[%s600 + $0x48] sm:$0xff]
    %v611 = vld [vmem:[%s600 + $0x50] sm:$0xff]
    %v612 = vld [vmem:[%s600 + $0x58] sm:$0xff]
    %v613 = vld [vmem:[%s600 + $0x60] sm:$0xff]
    %v614 = vld [vmem:[%s600 + $0x68] sm:$0xff]
    %v615 = vld [vmem:[%s600 + $0x70] sm:$0xff]
    %v616 = vld [vmem:[%s600 + $0x78] sm:$0xff]
    %s617 = scalar_lea.vmem %s8, 2
    %v618 = vld [vmem:[%s617] sm:$0x1]
    %v620 = vlaneseq
    %v621 = vshrl.u32 %v620, 7
    %v622 = vsub.s32 0, %v621
    %v623 = vrot.slane %v618, %v622
    %625 = vmatprep.subr.mxu0 0.0
    %626 = vmatpush1.msra.mxu0 %v601
    %627 = vmatprep.subr.mxu0 0.0
    %628 = vmatpush1.msra.mxu0 %v602
    %629 = vmatprep.subr.mxu0 0.0
    %630 = vmatpush1.msra.mxu0 %v603
    %631 = vmatprep.subr.mxu0 0.0
    %632 = vmatpush1.msra.mxu0 %v604
    %633 = vmatprep.subr.mxu0 0.0
    %634 = vmatpush1.msra.mxu0 %v605
    %635 = vmatprep.subr.mxu0 0.0
    %636 = vmatpush1.msra.mxu0 %v606
    %637 = vmatprep.subr.mxu0 0.0
    %638 = vmatpush1.msra.mxu0 %v607
    %639 = vmatprep.subr.mxu0 0.0
    %640 = vmatpush1.msra.mxu0 %v608
    %641 = vmatprep.subr.mxu0 0.0
    %642 = vmatpush1.msra.mxu0 %v609
    %643 = vmatprep.subr.mxu0 0.0
    %644 = vmatpush1.msra.mxu0 %v610
    %645 = vmatprep.subr.mxu0 0.0
    %646 = vmatpush1.msra.mxu0 %v611
    %647 = vmatprep.subr.mxu0 0.0
    %648 = vmatpush1.msra.mxu0 %v612
    %649 = vmatprep.subr.mxu0 0.0
    %650 = vmatpush1.msra.mxu0 %v613
    %651 = vmatprep.subr.mxu0 0.0
    %652 = vmatpush1.msra.mxu0 %v614
    %653 = vmatprep.subr.mxu0 0.0
    %654 = vmatpush1.msra.mxu0 %v615
    %655 = vmatprep.subr.mxu0 0.0
    %656 = vmatpush1.msra.mxu0 %v616
    %657 = vmatprep.subr.mxu0 0.0
    %658 = vmatpush1.msra.mxu0 0.0
    %659 = vmatprep.subr.mxu0 0.0
    %660 = vmatpush1.msra.mxu0 0.0
    %661 = vmatprep.subr.mxu0 0.0
    %662 = vmatpush1.msra.mxu0 0.0
    %663 = vmatprep.subr.mxu0 0.0
    %664 = vmatpush1.msra.mxu0 0.0
    %665 = vmatprep.subr.mxu0 0.0
    %666 = vmatpush1.msra.mxu0 0.0
    %667 = vmatprep.subr.mxu0 0.0
    %668 = vmatpush1.msra.mxu0 0.0
    %669 = vmatprep.subr.mxu0 0.0
    %670 = vmatpush1.msra.mxu0 0.0
    %671 = vmatprep.subr.mxu0 0.0
    %672 = vmatpush1.msra.mxu0 0.0
    %673 = vmatprep.subr.mxu0 0.0
    %674 = vmatpush1.msra.mxu0 0.0
    %675 = vmatprep.subr.mxu0 0.0
    %676 = vmatpush1.msra.mxu0 0.0
    %677 = vmatprep.subr.mxu0 0.0
    %678 = vmatpush1.msra.mxu0 0.0
    %679 = vmatprep.subr.mxu0 0.0
    %680 = vmatpush1.msra.mxu0 0.0
    %681 = vmatprep.subr.mxu0 0.0
    %682 = vmatpush1.msra.mxu0 0.0
    %683 = vmatprep.subr.mxu0 0.0
    %684 = vmatpush1.msra.mxu0 0.0
    %685 = vmatprep.subr.mxu0 0.0
    %686 = vmatpush1.msra.mxu0 0.0
    %687 = vmatprep.subr.mxu0 0.0
    %688 = vmatpush1.msra.mxu0 0.0
    %689 = vmatprep.mubr.f32.mxu0 0.0
    %690 = vmatmul.mubr.f32.gmra.mrb[0].mxu0 %v599
    %v691 = vpop.f32.mrb[0].mxu0
    %v692 = vadd.f32 %v623, %v691
    %v693 = vpop.f32.mrb[0].mxu0
    %694 = vdwg.mxu0
    %vm695 = vcmp.ge.f32.partialorder %v692, 0.0
    %v696 = vmul.f32 %v692, 0.2
    %v697 = vsel %vm695, %v692, %v696
    %v698 = vmul.f32 %v697, 1.4142135
    %s699 = scalar_lea.vmem [#allocation11], 384
    %v700 = vld [vmem:[%s699] sm:$0xff]
    %v701 = vld [vmem:[%s699 + $0x8] sm:$0xff]
    %v702 = vld [vmem:[%s699 + $0x10] sm:$0xff]
    %v703 = vld [vmem:[%s699 + $0x18] sm:$0xff]
    %v704 = vld [vmem:[%s699 + $0x20] sm:$0xff]
    %v705 = vld [vmem:[%s699 + $0x28] sm:$0xff]
    %v706 = vld [vmem:[%s699 + $0x30] sm:$0xff]
    %v707 = vld [vmem:[%s699 + $0x38] sm:$0xff]
    %v708 = vld [vmem:[%s699 + $0x40] sm:$0xff]
    %v709 = vld [vmem:[%s699 + $0x48] sm:$0xff]
    %v710 = vld [vmem:[%s699 + $0x50] sm:$0xff]
    %v711 = vld [vmem:[%s699 + $0x58] sm:$0xff]
    %v712 = vld [vmem:[%s699 + $0x60] sm:$0xff]
    %v713 = vld [vmem:[%s699 + $0x68] sm:$0xff]
    %v714 = vld [vmem:[%s699 + $0x70] sm:$0xff]
    %v715 = vld [vmem:[%s699 + $0x78] sm:$0xff]
    %s716 = scalar_lea.vmem %s8, 3
    %v717 = vld [vmem:[%s716] sm:$0x1]
    %v719 = vlaneseq
    %v720 = vshrl.u32 %v719, 7
    %v721 = vsub.s32 0, %v720
    %v722 = vrot.slane %v717, %v721
    %724 = vmatprep.subr.mxu0 0.0
    %725 = vmatpush1.msra.mxu0 %v700
    %726 = vmatprep.subr.mxu0 0.0
    %727 = vmatpush1.msra.mxu0 %v701
    %728 = vmatprep.subr.mxu0 0.0
    %729 = vmatpush1.msra.mxu0 %v702
    %730 = vmatprep.subr.mxu0 0.0
    %731 = vmatpush1.msra.mxu0 %v703
    %732 = vmatprep.subr.mxu0 0.0
    %733 = vmatpush1.msra.mxu0 %v704
    %734 = vmatprep.subr.mxu0 0.0
    %735 = vmatpush1.msra.mxu0 %v705
    %736 = vmatprep.subr.mxu0 0.0
    %737 = vmatpush1.msra.mxu0 %v706
    %738 = vmatprep.subr.mxu0 0.0
    %739 = vmatpush1.msra.mxu0 %v707
    %740 = vmatprep.subr.mxu0 0.0
    %741 = vmatpush1.msra.mxu0 %v708
    %742 = vmatprep.subr.mxu0 0.0
    %743 = vmatpush1.msra.mxu0 %v709
    %744 = vmatprep.subr.mxu0 0.0
    %745 = vmatpush1.msra.mxu0 %v710
    %746 = vmatprep.subr.mxu0 0.0
    %747 = vmatpush1.msra.mxu0 %v711
    %748 = vmatprep.subr.mxu0 0.0
    %749 = vmatpush1.msra.mxu0 %v712
    %750 = vmatprep.subr.mxu0 0.0
    %751 = vmatpush1.msra.mxu0 %v713
    %752 = vmatprep.subr.mxu0 0.0
    %753 = vmatpush1.msra.mxu0 %v714
    %754 = vmatprep.subr.mxu0 0.0
    %755 = vmatpush1.msra.mxu0 %v715
    %756 = vmatprep.subr.mxu0 0.0
    %757 = vmatpush1.msra.mxu0 0.0
    %758 = vmatprep.subr.mxu0 0.0
    %759 = vmatpush1.msra.mxu0 0.0
    %760 = vmatprep.subr.mxu0 0.0
    %761 = vmatpush1.msra.mxu0 0.0
    %762 = vmatprep.subr.mxu0 0.0
    %763 = vmatpush1.msra.mxu0 0.0
    %764 = vmatprep.subr.mxu0 0.0
    %765 = vmatpush1.msra.mxu0 0.0
    %766 = vmatprep.subr.mxu0 0.0
    %767 = vmatpush1.msra.mxu0 0.0
    %768 = vmatprep.subr.mxu0 0.0
    %769 = vmatpush1.msra.mxu0 0.0
    %770 = vmatprep.subr.mxu0 0.0
    %771 = vmatpush1.msra.mxu0 0.0
    %772 = vmatprep.subr.mxu0 0.0
    %773 = vmatpush1.msra.mxu0 0.0
    %774 = vmatprep.subr.mxu0 0.0
    %775 = vmatpush1.msra.mxu0 0.0
    %776 = vmatprep.subr.mxu0 0.0
    %777 = vmatpush1.msra.mxu0 0.0
    %778 = vmatprep.subr.mxu0 0.0
    %779 = vmatpush1.msra.mxu0 0.0
    %780 = vmatprep.subr.mxu0 0.0
    %781 = vmatpush1.msra.mxu0 0.0
    %782 = vmatprep.subr.mxu0 0.0
    %783 = vmatpush1.msra.mxu0 0.0
    %784 = vmatprep.subr.mxu0 0.0
    %785 = vmatpush1.msra.mxu0 0.0
    %786 = vmatprep.subr.mxu0 0.0
    %787 = vmatpush1.msra.mxu0 0.0
    %788 = vmatprep.mubr.f32.mxu0 0.0
    %789 = vmatmul.mubr.f32.gmra.mrb[0].mxu0 %v698
    %v790 = vpop.f32.mrb[0].mxu0
    %v791 = vadd.f32 %v722, %v790
    %v792 = vpop.f32.mrb[0].mxu0
    %793 = vdwg.mxu0
    %vm794 = vcmp.ge.f32.partialorder %v791, 0.0
    %v795 = vmul.f32 %v791, 0.2
    %v796 = vsel %vm794, %v791, %v795
    %v797 = vmul.f32 %v796, 1.4142135
    %s798 = scalar_lea.vmem [#allocation11], 512
    %v799 = vld [vmem:[%s798] sm:$0xff]
    %v800 = vld [vmem:[%s798 + $0x8] sm:$0xff]
    %v801 = vld [vmem:[%s798 + $0x10] sm:$0xff]
    %v802 = vld [vmem:[%s798 + $0x18] sm:$0xff]
    %v803 = vld [vmem:[%s798 + $0x20] sm:$0xff]
    %v804 = vld [vmem:[%s798 + $0x28] sm:$0xff]
    %v805 = vld [vmem:[%s798 + $0x30] sm:$0xff]
    %v806 = vld [vmem:[%s798 + $0x38] sm:$0xff]
    %v807 = vld [vmem:[%s798 + $0x40] sm:$0xff]
    %v808 = vld [vmem:[%s798 + $0x48] sm:$0xff]
    %v809 = vld [vmem:[%s798 + $0x50] sm:$0xff]
    %v810 = vld [vmem:[%s798 + $0x58] sm:$0xff]
    %v811 = vld [vmem:[%s798 + $0x60] sm:$0xff]
    %v812 = vld [vmem:[%s798 + $0x68] sm:$0xff]
    %v813 = vld [vmem:[%s798 + $0x70] sm:$0xff]
    %v814 = vld [vmem:[%s798 + $0x78] sm:$0xff]
    %s815 = scalar_lea.vmem %s8, 4
    %v816 = vld [vmem:[%s815] sm:$0x1]
    %v818 = vlaneseq
    %v819 = vshrl.u32 %v818, 7
    %v820 = vsub.s32 0, %v819
    %v821 = vrot.slane %v816, %v820
    %823 = vmatprep.subr.mxu0 0.0
    %824 = vmatpush1.msra.mxu0 %v799
    %825 = vmatprep.subr.mxu0 0.0
    %826 = vmatpush1.msra.mxu0 %v800
    %827 = vmatprep.subr.mxu0 0.0
    %828 = vmatpush1.msra.mxu0 %v801
    %829 = vmatprep.subr.mxu0 0.0
    %830 = vmatpush1.msra.mxu0 %v802
    %831 = vmatprep.subr.mxu0 0.0
    %832 = vmatpush1.msra.mxu0 %v803
    %833 = vmatprep.subr.mxu0 0.0
    %834 = vmatpush1.msra.mxu0 %v804
    %835 = vmatprep.subr.mxu0 0.0
    %836 = vmatpush1.msra.mxu0 %v805
    %837 = vmatprep.subr.mxu0 0.0
    %838 = vmatpush1.msra.mxu0 %v806
    %839 = vmatprep.subr.mxu0 0.0
    %840 = vmatpush1.msra.mxu0 %v807
    %841 = vmatprep.subr.mxu0 0.0
    %842 = vmatpush1.msra.mxu0 %v808
    %843 = vmatprep.subr.mxu0 0.0
    %844 = vmatpush1.msra.mxu0 %v809
    %845 = vmatprep.subr.mxu0 0.0
    %846 = vmatpush1.msra.mxu0 %v810
    %847 = vmatprep.subr.mxu0 0.0
    %848 = vmatpush1.msra.mxu0 %v811
    %849 = vmatprep.subr.mxu0 0.0
    %850 = vmatpush1.msra.mxu0 %v812
    %851 = vmatprep.subr.mxu0 0.0
    %852 = vmatpush1.msra.mxu0 %v813
    %853 = vmatprep.subr.mxu0 0.0
    %854 = vmatpush1.msra.mxu0 %v814
    %855 = vmatprep.subr.mxu0 0.0
    %856 = vmatpush1.msra.mxu0 0.0
    %857 = vmatprep.subr.mxu0 0.0
    %858 = vmatpush1.msra.mxu0 0.0
    %859 = vmatprep.subr.mxu0 0.0
    %860 = vmatpush1.msra.mxu0 0.0
    %861 = vmatprep.subr.mxu0 0.0
    %862 = vmatpush1.msra.mxu0 0.0
    %863 = vmatprep.subr.mxu0 0.0
    %864 = vmatpush1.msra.mxu0 0.0
    %865 = vmatprep.subr.mxu0 0.0
    %866 = vmatpush1.msra.mxu0 0.0
    %867 = vmatprep.subr.mxu0 0.0
    %868 = vmatpush1.msra.mxu0 0.0
    %869 = vmatprep.subr.mxu0 0.0
    %870 = vmatpush1.msra.mxu0 0.0
    %871 = vmatprep.subr.mxu0 0.0
    %872 = vmatpush1.msra.mxu0 0.0
    %873 = vmatprep.subr.mxu0 0.0
    %874 = vmatpush1.msra.mxu0 0.0
    %875 = vmatprep.subr.mxu0 0.0
    %876 = vmatpush1.msra.mxu0 0.0
    %877 = vmatprep.subr.mxu0 0.0
    %878 = vmatpush1.msra.mxu0 0.0
    %879 = vmatprep.subr.mxu0 0.0
    %880 = vmatpush1.msra.mxu0 0.0
    %881 = vmatprep.subr.mxu0 0.0
    %882 = vmatpush1.msra.mxu0 0.0
    %883 = vmatprep.subr.mxu0 0.0
    %884 = vmatpush1.msra.mxu0 0.0
    %885 = vmatprep.subr.mxu0 0.0
    %886 = vmatpush1.msra.mxu0 0.0
    %887 = vmatprep.mubr.f32.mxu0 0.0
    %888 = vmatmul.mubr.f32.gmra.mrb[0].mxu0 %v797
    %v889 = vpop.f32.mrb[0].mxu0
    %v890 = vadd.f32 %v821, %v889
    %v891 = vpop.f32.mrb[0].mxu0
    %892 = vdwg.mxu0
    %vm893 = vcmp.ge.f32.partialorder %v890, 0.0
    %v894 = vmul.f32 %v890, 0.2
    %v895 = vsel %vm893, %v890, %v894
    %v896 = vmul.f32 %v895, 1.4142135
    %s897 = scalar_lea.vmem [#allocation11], 640
    %v898 = vld [vmem:[%s897] sm:$0xff]
    %v899 = vld [vmem:[%s897 + $0x8] sm:$0xff]
    %v900 = vld [vmem:[%s897 + $0x10] sm:$0xff]
    %v901 = vld [vmem:[%s897 + $0x18] sm:$0xff]
    %v902 = vld [vmem:[%s897 + $0x20] sm:$0xff]
    %v903 = vld [vmem:[%s897 + $0x28] sm:$0xff]
    %v904 = vld [vmem:[%s897 + $0x30] sm:$0xff]
    %v905 = vld [vmem:[%s897 + $0x38] sm:$0xff]
    %v906 = vld [vmem:[%s897 + $0x40] sm:$0xff]
    %v907 = vld [vmem:[%s897 + $0x48] sm:$0xff]
    %v908 = vld [vmem:[%s897 + $0x50] sm:$0xff]
    %v909 = vld [vmem:[%s897 + $0x58] sm:$0xff]
    %v910 = vld [vmem:[%s897 + $0x60] sm:$0xff]
    %v911 = vld [vmem:[%s897 + $0x68] sm:$0xff]
    %v912 = vld [vmem:[%s897 + $0x70] sm:$0xff]
    %v913 = vld [vmem:[%s897 + $0x78] sm:$0xff]
    %s914 = scalar_lea.vmem %s8, 5
    %v915 = vld [vmem:[%s914] sm:$0x1]
    %v917 = vlaneseq
    %v918 = vshrl.u32 %v917, 7
    %v919 = vsub.s32 0, %v918
    %v920 = vrot.slane %v915, %v919
    %922 = vmatprep.subr.mxu0 0.0
    %923 = vmatpush1.msra.mxu0 %v898
    %924 = vmatprep.subr.mxu0 0.0
    %925 = vmatpush1.msra.mxu0 %v899
    %926 = vmatprep.subr.mxu0 0.0
    %927 = vmatpush1.msra.mxu0 %v900
    %928 = vmatprep.subr.mxu0 0.0
    %929 = vmatpush1.msra.mxu0 %v901
    %930 = vmatprep.subr.mxu0 0.0
    %931 = vmatpush1.msra.mxu0 %v902
    %932 = vmatprep.subr.mxu0 0.0
    %933 = vmatpush1.msra.mxu0 %v903
    %934 = vmatprep.subr.mxu0 0.0
    %935 = vmatpush1.msra.mxu0 %v904
    %936 = vmatprep.subr.mxu0 0.0
    %937 = vmatpush1.msra.mxu0 %v905
    %938 = vmatprep.subr.mxu0 0.0
    %939 = vmatpush1.msra.mxu0 %v906
    %940 = vmatprep.subr.mxu0 0.0
    %941 = vmatpush1.msra.mxu0 %v907
    %942 = vmatprep.subr.mxu0 0.0
    %943 = vmatpush1.msra.mxu0 %v908
    %944 = vmatprep.subr.mxu0 0.0
    %945 = vmatpush1.msra.mxu0 %v909
    %946 = vmatprep.subr.mxu0 0.0
    %947 = vmatpush1.msra.mxu0 %v910
    %948 = vmatprep.subr.mxu0 0.0
    %949 = vmatpush1.msra.mxu0 %v911
    %950 = vmatprep.subr.mxu0 0.0
    %951 = vmatpush1.msra.mxu0 %v912
    %952 = vmatprep.subr.mxu0 0.0
    %953 = vmatpush1.msra.mxu0 %v913
    %954 = vmatprep.subr.mxu0 0.0
    %955 = vmatpush1.msra.mxu0 0.0
    %956 = vmatprep.subr.mxu0 0.0
    %957 = vmatpush1.msra.mxu0 0.0
    %958 = vmatprep.subr.mxu0 0.0
    %959 = vmatpush1.msra.mxu0 0.0
    %960 = vmatprep.subr.mxu0 0.0
    %961 = vmatpush1.msra.mxu0 0.0
    %962 = vmatprep.subr.mxu0 0.0
    %963 = vmatpush1.msra.mxu0 0.0
    %964 = vmatprep.subr.mxu0 0.0
    %965 = vmatpush1.msra.mxu0 0.0
    %966 = vmatprep.subr.mxu0 0.0
    %967 = vmatpush1.msra.mxu0 0.0
    %968 = vmatprep.subr.mxu0 0.0
    %969 = vmatpush1.msra.mxu0 0.0
    %970 = vmatprep.subr.mxu0 0.0
    %971 = vmatpush1.msra.mxu0 0.0
    %972 = vmatprep.subr.mxu0 0.0
    %973 = vmatpush1.msra.mxu0 0.0
    %974 = vmatprep.subr.mxu0 0.0
    %975 = vmatpush1.msra.mxu0 0.0
    %976 = vmatprep.subr.mxu0 0.0
    %977 = vmatpush1.msra.mxu0 0.0
    %978 = vmatprep.subr.mxu0 0.0
    %979 = vmatpush1.msra.mxu0 0.0
    %980 = vmatprep.subr.mxu0 0.0
    %981 = vmatpush1.msra.mxu0 0.0
    %982 = vmatprep.subr.mxu0 0.0
    %983 = vmatpush1.msra.mxu0 0.0
    %984 = vmatprep.subr.mxu0 0.0
    %985 = vmatpush1.msra.mxu0 0.0
    %986 = vmatprep.mubr.f32.mxu0 0.0
    %987 = vmatmul.mubr.f32.gmra.mrb[0].mxu0 %v896
    %v988 = vpop.f32.mrb[0].mxu0
    %v989 = vadd.f32 %v920, %v988
    %v990 = vpop.f32.mrb[0].mxu0
    %991 = vdwg.mxu0
    %vm992 = vcmp.ge.f32.partialorder %v989, 0.0
    %v993 = vmul.f32 %v989, 0.2
    %v994 = vsel %vm992, %v989, %v993
    %v995 = vmul.f32 %v994, 1.4142135
    %s996 = scalar_lea.vmem [#allocation11], 768
    %v997 = vld [vmem:[%s996] sm:$0xff]
    %v998 = vld [vmem:[%s996 + $0x8] sm:$0xff]
    %v999 = vld [vmem:[%s996 + $0x10] sm:$0xff]
    %v1000 = vld [vmem:[%s996 + $0x18] sm:$0xff]
    %v1001 = vld [vmem:[%s996 + $0x20] sm:$0xff]
    %v1002 = vld [vmem:[%s996 + $0x28] sm:$0xff]
    %v1003 = vld [vmem:[%s996 + $0x30] sm:$0xff]
    %v1004 = vld [vmem:[%s996 + $0x38] sm:$0xff]
    %v1005 = vld [vmem:[%s996 + $0x40] sm:$0xff]
    %v1006 = vld [vmem:[%s996 + $0x48] sm:$0xff]
    %v1007 = vld [vmem:[%s996 + $0x50] sm:$0xff]
    %v1008 = vld [vmem:[%s996 + $0x58] sm:$0xff]
    %v1009 = vld [vmem:[%s996 + $0x60] sm:$0xff]
    %v1010 = vld [vmem:[%s996 + $0x68] sm:$0xff]
    %v1011 = vld [vmem:[%s996 + $0x70] sm:$0xff]
    %v1012 = vld [vmem:[%s996 + $0x78] sm:$0xff]
    %s1013 = scalar_lea.vmem %s8, 6
    %v1014 = vld [vmem:[%s1013] sm:$0x1]
    %v1016 = vlaneseq
    %v1017 = vshrl.u32 %v1016, 7
    %v1018 = vsub.s32 0, %v1017
    %v1019 = vrot.slane %v1014, %v1018
    %1021 = vmatprep.subr.mxu0 0.0
    %1022 = vmatpush1.msra.mxu0 %v997
    %1023 = vmatprep.subr.mxu0 0.0
    %1024 = vmatpush1.msra.mxu0 %v998
    %1025 = vmatprep.subr.mxu0 0.0
    %1026 = vmatpush1.msra.mxu0 %v999
    %1027 = vmatprep.subr.mxu0 0.0
    %1028 = vmatpush1.msra.mxu0 %v1000
    %1029 = vmatprep.subr.mxu0 0.0
    %1030 = vmatpush1.msra.mxu0 %v1001
    %1031 = vmatprep.subr.mxu0 0.0
    %1032 = vmatpush1.msra.mxu0 %v1002
    %1033 = vmatprep.subr.mxu0 0.0
    %1034 = vmatpush1.msra.mxu0 %v1003
    %1035 = vmatprep.subr.mxu0 0.0
    %1036 = vmatpush1.msra.mxu0 %v1004
    %1037 = vmatprep.subr.mxu0 0.0
    %1038 = vmatpush1.msra.mxu0 %v1005
    %1039 = vmatprep.subr.mxu0 0.0
    %1040 = vmatpush1.msra.mxu0 %v1006
    %1041 = vmatprep.subr.mxu0 0.0
    %1042 = vmatpush1.msra.mxu0 %v1007
    %1043 = vmatprep.subr.mxu0 0.0
    %1044 = vmatpush1.msra.mxu0 %v1008
    %1045 = vmatprep.subr.mxu0 0.0
    %1046 = vmatpush1.msra.mxu0 %v1009
    %1047 = vmatprep.subr.mxu0 0.0
    %1048 = vmatpush1.msra.mxu0 %v1010
    %1049 = vmatprep.subr.mxu0 0.0
    %1050 = vmatpush1.msra.mxu0 %v1011
    %1051 = vmatprep.subr.mxu0 0.0
    %1052 = vmatpush1.msra.mxu0 %v1012
    %1053 = vmatprep.subr.mxu0 0.0
    %1054 = vmatpush1.msra.mxu0 0.0
    %1055 = vmatprep.subr.mxu0 0.0
    %1056 = vmatpush1.msra.mxu0 0.0
    %1057 = vmatprep.subr.mxu0 0.0
    %1058 = vmatpush1.msra.mxu0 0.0
    %1059 = vmatprep.subr.mxu0 0.0
    %1060 = vmatpush1.msra.mxu0 0.0
    %1061 = vmatprep.subr.mxu0 0.0
    %1062 = vmatpush1.msra.mxu0 0.0
    %1063 = vmatprep.subr.mxu0 0.0
    %1064 = vmatpush1.msra.mxu0 0.0
    %1065 = vmatprep.subr.mxu0 0.0
    %1066 = vmatpush1.msra.mxu0 0.0
    %1067 = vmatprep.subr.mxu0 0.0
    %1068 = vmatpush1.msra.mxu0 0.0
    %1069 = vmatprep.subr.mxu0 0.0
    %1070 = vmatpush1.msra.mxu0 0.0
    %1071 = vmatprep.subr.mxu0 0.0
    %1072 = vmatpush1.msra.mxu0 0.0
    %1073 = vmatprep.subr.mxu0 0.0
    %1074 = vmatpush1.msra.mxu0 0.0
    %1075 = vmatprep.subr.mxu0 0.0
    %1076 = vmatpush1.msra.mxu0 0.0
    %1077 = vmatprep.subr.mxu0 0.0
    %1078 = vmatpush1.msra.mxu0 0.0
    %1079 = vmatprep.subr.mxu0 0.0
    %1080 = vmatpush1.msra.mxu0 0.0
    %1081 = vmatprep.subr.mxu0 0.0
    %1082 = vmatpush1.msra.mxu0 0.0
    %1083 = vmatprep.subr.mxu0 0.0
    %1084 = vmatpush1.msra.mxu0 0.0
    %1085 = vmatprep.mubr.f32.mxu0 0.0
    %1086 = vmatmul.mubr.f32.gmra.mrb[0].mxu0 %v995
    %v1087 = vpop.f32.mrb[0].mxu0
    %v1088 = vadd.f32 %v1019, %v1087
    %v1089 = vpop.f32.mrb[0].mxu0
    %1090 = vdwg.mxu0
    %vm1091 = vcmp.ge.f32.partialorder %v1088, 0.0
    %v1092 = vmul.f32 %v1088, 0.2
    %v1093 = vsel %vm1091, %v1088, %v1092
    %v1094 = vmul.f32 %v1093, 1.4142135
    %1095 = vst [vmem:[#allocation13] sm:$0xff] %v1094
    // Predicated region
    $region62: #{tpu_custom_call.1} parent=1 // pred_check
      _
    $region63: #{tpu_custom_call.1} parent=1 // pred_check_branch
      %1097 = sbr.rel (0) target = $region65
    $region64: #{tpu_custom_call.1} parent=1 // pred_region
      %s1099 = ssub.s32 128, 128
      %1100 = vsyncadd [#allocation4], %s1099
      %s1102 = sshll.u32 [#allocation13], 4
      %s1103 = int_to_ptr.vmem [resolvable:$true] %s1102
      %1105 = dma.vmem_to_hbm [thread:$0]  %s1103, 128, %s9, [#allocation4]
    $region65: #{tpu_custom_call.1} parent=1 // pred_fallthru
      _
    // Predicated region
    $region66: #{tpu_custom_call.1} parent=1 // pred_check
      _
    $region67: #{tpu_custom_call.1} parent=1 // pred_check_branch
      %1107 = sbr.rel (0) target = $region69
    $region68: #{tpu_custom_call.1} parent=1 // pred_region
      %1108 = dma.done [#allocation4], 128
    $region69: #{tpu_custom_call.1} parent=1 // pred_fallthru
      _
    %1109 = vsyncpa [#allocation3], 1
    %1110 = vsyncpa [#allocation6], 1
    %1111 = vsyncpa [#allocation9], 1
    %1112 = vsyncpa [#allocation12], 1
    %1113 = vsyncpa [#allocation4], 1

</llo_original>
